<compile_context>
chip_gen: v6e
topology: v6e:2x2x1
jax: 0.10.0
libtpu: 0.0.40
codegen_flags: <defaults>
</compile_context>

<pallas_src>
import jax
import jax.numpy as jnp
from jax.experimental import pallas as pl
from jax.experimental.pallas import tpu as pltpu

H = 768                # BERT hidden size (matches nn.Linear(768, 2) input)
NUM_CLASSES = 2
NUM_CLASSES_PAD = 128  # lane-dense logits output; real classes sliced off outside


def cls_kernel(x_ref, e_ref, wp_ref, bp_ref, wc_ref, bc_ref, out_ref, acc_ref):
    # x_ref : [TB, TK] bf16  slice of X = [bag-of-word-ids | bag-of-type-ids | pool-w]
    # e_ref : [TK, H]  bf16  matching slice of E = [word_emb ; tt_emb ; pos_emb[:S]]
    # wp_ref: [H, H]   bf16  BERT pooler dense (VMEM resident, constant index_map)
    # bp_ref: [1, H]   f32
    # wc_ref: [H, 128] bf16  lane-padded classification head (VMEM resident)
    # bc_ref: [1, 128] f32
    # out_ref: [TB, 128] f32
    # acc_ref: [TB, H] f32 scratch -- pooled-feature accumulator over K chunks
    k = pl.program_id(1)

    @pl.when(k == 0)
    def _():
        acc_ref[...] = jnp.zeros_like(acc_ref)

    # feat += X_tile @ E_tile  (MXU, bf16 operands, f32 accumulation)
    acc_ref[...] += jnp.dot(x_ref[...], e_ref[...],
                            preferred_element_type=jnp.float32)

    @pl.when(k == pl.num_programs(1) - 1)
    def _():
        feat = acc_ref[...].astype(jnp.bfloat16)
        # BERT pooler: tanh(feat @ W_pool + b_pool)  (MXU + EUP)
        pooled = jnp.tanh(
            jnp.dot(feat, wp_ref[...], preferred_element_type=jnp.float32)
            + bp_ref[...]
        ).astype(jnp.bfloat16)
        # Classification head, lane-padded to 128 outputs -> dense unmasked store.
        out_ref[...] = (
            jnp.dot(pooled, wc_ref[...], preferred_element_type=jnp.float32)
            + bc_ref[...]
        )


def _round_up(x, m):
    return (x + m - 1) // m * m


def init_params(key, vocab_size=100, type_vocab_size=2, max_pos=16):
    k = jax.random.split(key, 6)
    scale = 0.02
    return {
        "word_emb": scale * jax.random.normal(k[0], (vocab_size, H), jnp.float32),
        "tt_emb":   scale * jax.random.normal(k[1], (type_vocab_size, H), jnp.float32),
        "pos_emb":  scale * jax.random.normal(k[2], (max_pos, H), jnp.float32),
        "w_pool":   scale * jax.random.normal(k[3], (H, H), jnp.float32),
        "b_pool":   jnp.zeros((H,), jnp.float32),
        "w_cls":    scale * jax.random.normal(k[4], (H, NUM_CLASSES), jnp.float32),
        "b_cls":    0.01 * jax.random.normal(k[5], (NUM_CLASSES,), jnp.float32),
    }


@jax.jit
def cls_model_forward(input_ids, attention_mask, token_type_ids, params):
    B, S = input_ids.shape
    vocab = params["word_emb"].shape[0]
    tvocab = params["tt_emb"].shape[0]
    assert params["pos_emb"].shape[0] >= S, "sequence longer than position table"

    # ---- Pooling weights with the CLS token folded in:
    #      feat = hidden[:, 0, :] + sum_s mask*hidden / max(len, 1) = sum_s w * hidden
    mask = attention_mask.astype(jnp.float32)
    msum = jnp.maximum(jnp.sum(mask, axis=1, keepdims=True), 1.0)
    w = mask / msum + (jnp.arange(S) == 0).astype(jnp.float32)[None, :]      # [B, S]

    # ---- Weighted bag-of-token-ids (token-level scatter-adds, tiny).  Since
    #      embedding lookup and pooling are both linear: feat = X @ E. ----
    rows = jnp.arange(B)[:, None]
    bow = jnp.zeros((B, vocab), jnp.float32).at[rows, input_ids].add(w)       # [B, V]
    bot = jnp.zeros((B, tvocab), jnp.float32).at[rows, token_type_ids].add(w)  # [B, T]
    X = jnp.concatenate([bow, bot, w], axis=1)                               # [B, K]
    E = jnp.concatenate([params["word_emb"], params["tt_emb"],
                         params["pos_emb"][:S]], axis=0)                     # [K, H]
    K = vocab + tvocab + S

    # ---- Batch tiling: TB multiple of 16 (bf16 sublane packing), capped at 256
    #      (MXU M dim); guarantee >= 2 batch tiles when B allows (v7x megacore). ----
    TB = min(256, _round_up(B, 16))
    if _round_up(B, 16) >= 32 and _round_up(B, 16) // TB < 2:
        TB = max(16, (_round_up(B, 16) // 2) // 16 * 16)
    B_pad = _round_up(B, TB)

    # ---- K (reduction) tiling: 128-multiple chunks, accumulator in the kernel. ----
    TK = min(512, _round_up(K, 128))
    K_pad = _round_up(K, TK)

    # Only tiny token-level tensors get padded (no [B,S,H] pad anymore).
    X = jnp.pad(X, ((0, B_pad - B), (0, K_pad - K))).astype(jnp.bfloat16)
    E = jnp.pad(E, ((0, K_pad - K), (0, 0))).astype(jnp.bfloat16)

    # ---- Resident weights: bf16 matmul operands, f32 biases; cls head padded
    #      to 128 lanes for a dense (unmasked) store. ----
    wp = params["w_pool"].astype(jnp.bfloat16)
    bp = params["b_pool"][None, :].astype(jnp.float32)
    wc = jnp.zeros((H, NUM_CLASSES_PAD), jnp.float32)
    wc = wc.at[:, :NUM_CLASSES].set(params["w_cls"]).astype(jnp.bfloat16)
    bc = jnp.zeros((1, NUM_CLASSES_PAD), jnp.float32)
    bc = bc.at[:, :NUM_CLASSES].set(params["b_cls"][None, :])

    grid = (B_pad // TB, K_pad // TK)

    # ---- VMEM budget: 2x double-buffered streamed tiles + 1x resident weights
    #      + accumulator + 4 MiB margin, capped well below v7x's 64 MiB. ----
    x_tile = TB * TK * 2
    e_tile = TK * H * 2
    o_tile = TB * NUM_CLASSES_PAD * 4
    weight_bytes = (H * H + H * NUM_CLASSES_PAD) * 2 + (H + NUM_CLASSES_PAD) * 4
    acc_bytes = TB * H * 4
    vmem_limit = int(min(48 * 1024 * 1024,
                         2 * (x_tile + e_tile + o_tile)
                         + weight_bytes + acc_bytes + 4 * 1024 * 1024))

    cost = pl.CostEstimate(
        flops=2 * B_pad * K_pad * H + 2 * B_pad * H * H
              + 2 * B_pad * H * NUM_CLASSES_PAD,
        transcendentals=B_pad * H,
        bytes_accessed=(B_pad * K_pad + K_pad * H + H * H
                        + H * NUM_CLASSES_PAD) * 2
                       + (B_pad * NUM_CLASSES_PAD + H + NUM_CLASSES_PAD) * 4,
    )

    logits_pad = pl.pallas_call(
        cls_kernel,
        out_shape=jax.ShapeDtypeStruct((B_pad, NUM_CLASSES_PAD), jnp.float32),
        grid=grid,
        in_specs=[
            pl.BlockSpec((TB, TK), lambda b, k: (b, k)),               # X tile
            pl.BlockSpec((TK, H), lambda b, k: (k, 0)),                # E tile
            pl.BlockSpec((H, H), lambda b, k: (0, 0)),                 # w_pool (resident)
            pl.BlockSpec((1, H), lambda b, k: (0, 0)),                 # b_pool
            pl.BlockSpec((H, NUM_CLASSES_PAD), lambda b, k: (0, 0)),   # w_cls (padded)
            pl.BlockSpec((1, NUM_CLASSES_PAD), lambda b, k: (0, 0)),   # b_cls (padded)
        ],
        out_specs=pl.BlockSpec((TB, NUM_CLASSES_PAD), lambda b, k: (b, 0)),
        scratch_shapes=[pltpu.VMEM((TB, H), jnp.float32)],
        compiler_params=pltpu.CompilerParams(
            dimension_semantics=("parallel", "arbitrary"),
            vmem_limit_bytes=vmem_limit,
        ),
        cost_estimate=cost,
    )(X, E, wp, bp, wc, bc)

    return logits_pad[:B, :NUM_CLASSES]


def reference_forward(input_ids, attention_mask, token_type_ids, params):
    # Straightforward f32 path: gather hidden[B,S,H], pool, pooler, linear.
    B, S = input_ids.shape
    word = jnp.take(params["word_emb"], input_ids, axis=0)
    ttyp = jnp.take(params["tt_emb"], token_type_ids, axis=0)
    pos = params["pos_emb"][None, :S, :]
    hidden = word + ttyp + pos
    mask = attention_mask.astype(jnp.float32)
    cls_tok = hidden[:, 0, :]
    pooled = jnp.sum(hidden * mask[:, :, None], axis=1) / jnp.maximum(
        jnp.sum(mask, axis=1, keepdims=True), 1.0
    )
    feat = cls_tok + pooled
    pooler_out = jnp.tanh(feat @ params["w_pool"] + params["b_pool"])
    return pooler_out @ params["w_cls"] + params["b_cls"]


if __name__ == "__main__":
    root = jax.random.PRNGKey(0)
    k_small, k_large = jax.random.split(root)

    # ---- small-shape check (B=2, S=8) ----
    pkey, ikey = jax.random.split(k_small)
    params = init_params(pkey, vocab_size=100, type_vocab_size=2, max_pos=16)
    B, S = 2, 8
    input_ids = jax.random.randint(ikey, (B, S), 0, 100, dtype=jnp.int32)
    attention_mask = jnp.array(
        [[1, 1, 1, 1, 1, 1, 0, 0],
         [1, 1, 1, 1, 0, 0, 0, 0]], dtype=jnp.int32
    )
    token_type_ids = jnp.zeros((B, S), dtype=jnp.int32)

    out = cls_model_forward(input_ids, attention_mask, token_type_ids, params)
    out = jax.block_until_ready(out)
    ref = reference_forward(input_ids, attention_mask, token_type_ids, params)
    assert out.shape == (B, NUM_CLASSES), out.shape
    # bf16 matmul operands (f32 accumulation) -> loosened tolerance vs f32 reference.
    assert jnp.allclose(out, ref, atol=2e-2, rtol=2e-2), (out, ref)

    # ---- larger-shape check: exercises multi-tile batch grid, K-chunk
    #      accumulation, padding and the VMEM-budget branches. ----
    pkey2, ikey2, mkey2 = jax.random.split(k_large, 3)
    params2 = init_params(pkey2, vocab_size=600, type_vocab_size=2, max_pos=32)
    B2, S2 = 100, 16
    ids2 = jax.random.randint(ikey2, (B2, S2), 0, 600, dtype=jnp.int32)
    lens2 = jax.random.randint(mkey2, (B2,), 1, S2 + 1, dtype=jnp.int32)
    mask2 = (jnp.arange(S2)[None, :] < lens2[:, None]).astype(jnp.int32)
    tt2 = jnp.broadcast_to((jnp.arange(S2) >= S2 // 2).astype(jnp.int32), (B2, S2))

    out2 = cls_model_forward(ids2, mask2, tt2, params2)
    out2 = jax.block_until_ready(out2)
    ref2 = reference_forward(ids2, mask2, tt2, params2)
    assert out2.shape == (B2, NUM_CLASSES), out2.shape
    assert jnp.allclose(out2, ref2, atol=2e-2, rtol=2e-2), (out2, ref2)

    print("KERNEL_OK")
</pallas_src>

<mosaic_0001>
module attributes {stable_mosaic.version = 11 : i64} {
  func.func private @main(%arg0: i32) attributes {dimension_semantics = [#tpu.dimension_semantics<core_parallel>], iteration_bounds = array<i64: 2>, tpu.core_type = #tpu.core_type<sc_scalar_subcore>, window_params = []} {
    return
  }
}

module attributes {stable_mosaic.version = 11 : i64} {
  func.func private @main(%arg0: i32) attributes {dimension_semantics = [#tpu.dimension_semantics<core_parallel>], iteration_bounds = array<i64: 2>, tpu.core_type = #tpu.core_type<sc_scalar_subcore>, window_params = []} {
    return
  }
}

module attributes {stable_mosaic.version = 11 : i64} {
  func.func @cls_kernel(%arg0: i32, %arg1: i32, %arg2: memref<16x128xbf16, #tpu.memory_space<vmem>>, %arg3: memref<128x768xbf16, #tpu.memory_space<vmem>>, %arg4: memref<768x768xbf16, #tpu.memory_space<vmem>>, %arg5: memref<1x768xf32, #tpu.memory_space<vmem>>, %arg6: memref<768x128xbf16, #tpu.memory_space<vmem>>, %arg7: memref<1x128xf32, #tpu.memory_space<vmem>>, %arg8: memref<16x128xf32, #tpu.memory_space<vmem>>, %arg9: memref<16x768xf32, #tpu.memory_space<vmem>>) attributes {dimension_semantics = [#tpu.dimension_semantics<parallel>, #tpu.dimension_semantics<arbitrary>], iteration_bounds = array<i64: 1, 1>, scalar_prefetch = 0 : i64, scratch_operands = 1 : i64, tpu.core_type = #tpu.core_type<tc>, window_params = [{transform_indices = @transform_0, window_bounds = array<i64: 16, 128>}, {transform_indices = @transform_1, window_bounds = array<i64: 128, 768>}, {pipeline_mode = #tpu.pipeline_mode<synchronous>, transform_indices = @transform_2, window_bounds = array<i64: 768, 768>}, {pipeline_mode = #tpu.pipeline_mode<synchronous>, transform_indices = @transform_3, window_bounds = array<i64: 1, 768>}, {pipeline_mode = #tpu.pipeline_mode<synchronous>, transform_indices = @transform_4, window_bounds = array<i64: 768, 128>}, {pipeline_mode = #tpu.pipeline_mode<synchronous>, transform_indices = @transform_5, window_bounds = array<i64: 1, 128>}, {transform_indices = @transform_6, window_bounds = array<i64: 16, 128>}]} {
    %c0_i32 = arith.constant 0 : i32
    %0 = arith.cmpi eq, %arg1, %c0_i32 : i32
    %1 = arith.extui %0 : i1 to i32
    %c0_i32_0 = arith.constant 0 : i32
    %2 = arith.cmpi ne, %1, %c0_i32_0 : i32
    scf.if %2 {
      %cst_10 = arith.constant 0.000000e+00 : f32
      %12 = vector.broadcast %cst_10 : f32 to vector<16x768xf32>
      %c0_11 = arith.constant 0 : index
      %c0_12 = arith.constant 0 : index
      %13 = vector.load %arg9[%c0_11, %c0_12] : memref<16x768xf32, #tpu.memory_space<vmem>>, vector<16x768xf32>
      tpu.vector_store %arg9[%c0_11, %c0_12], %12 {strides = array<i32>} : memref<16x768xf32, #tpu.memory_space<vmem>>, vector<16x768xf32>,
    } else {
    }
    %c0 = arith.constant 0 : index
    %c0_1 = arith.constant 0 : index
    %3 = vector.load %arg9[%c0, %c0_1] : memref<16x768xf32, #tpu.memory_space<vmem>>, vector<16x768xf32>
    %c0_2 = arith.constant 0 : index
    %c0_3 = arith.constant 0 : index
    %4 = vector.load %arg2[%c0_2, %c0_3] : memref<16x128xbf16, #tpu.memory_space<vmem>>, vector<16x128xbf16>
    %c0_4 = arith.constant 0 : index
    %c0_5 = arith.constant 0 : index
    %5 = vector.load %arg3[%c0_4, %c0_5] : memref<128x768xbf16, #tpu.memory_space<vmem>>, vector<128x768xbf16>
    %cst = arith.constant dense<0.000000e+00> : vector<16x768xf32>
    %6 = tpu.matmul %4, %5, %cst {dimension_numbers = #tpu.dot_dimension_numbers<[1], [0], [0], [1], [0, 0, 1, 1], [], []>} : vector<16x128xbf16>, vector<128x768xbf16>, vector<16x768xf32> -> vector<16x768xf32>
    %7 = arith.addf %3, %6 : vector<16x768xf32>
    %c0_6 = arith.constant 0 : index
    %c0_7 = arith.constant 0 : index
    %8 = vector.load %arg9[%c0_6, %c0_7] : memref<16x768xf32, #tpu.memory_space<vmem>>, vector<16x768xf32>
    tpu.vector_store %arg9[%c0_6, %c0_7], %7 {strides = array<i32>} : memref<16x768xf32, #tpu.memory_space<vmem>>, vector<16x768xf32>,
    %c0_i32_8 = arith.constant 0 : i32
    %9 = arith.cmpi eq, %arg1, %c0_i32_8 : i32
    %10 = arith.extui %9 : i1 to i32
    %c0_i32_9 = arith.constant 0 : i32
    %11 = arith.cmpi ne, %10, %c0_i32_9 : i32
    scf.if %11 {
      %c0_10 = arith.constant 0 : index
      %c0_11 = arith.constant 0 : index
      %12 = vector.load %arg9[%c0_10, %c0_11] : memref<16x768xf32, #tpu.memory_space<vmem>>, vector<16x768xf32>
      %13 = arith.truncf %12 : vector<16x768xf32> to vector<16x768xbf16>
      %c0_12 = arith.constant 0 : index
      %c0_13 = arith.constant 0 : index
      %14 = vector.load %arg4[%c0_12, %c0_13] : memref<768x768xbf16, #tpu.memory_space<vmem>>, vector<768x768xbf16>
      %cst_14 = arith.constant dense<0.000000e+00> : vector<16x768xf32>
      %15 = tpu.matmul %13, %14, %cst_14 {dimension_numbers = #tpu.dot_dimension_numbers<[1], [0], [0], [1], [0, 0, 1, 1], [], []>} : vector<16x768xbf16>, vector<768x768xbf16>, vector<16x768xf32> -> vector<16x768xf32>
      %c0_15 = arith.constant 0 : index
      %c0_16 = arith.constant 0 : index
      %16 = vector.load %arg5[%c0_15, %c0_16] : memref<1x768xf32, #tpu.memory_space<vmem>>, vector<1x768xf32>
      %17 = vector.broadcast %16 : vector<1x768xf32> to vector<16x768xf32>
      %18 = arith.addf %15, %17 : vector<16x768xf32>
      %19 = math.tanh %18 : vector<16x768xf32>
      %20 = arith.truncf %19 : vector<16x768xf32> to vector<16x768xbf16>
      %c0_17 = arith.constant 0 : index
      %c0_18 = arith.constant 0 : index
      %21 = vector.load %arg6[%c0_17, %c0_18] : memref<768x128xbf16, #tpu.memory_space<vmem>>, vector<768x128xbf16>
      %cst_19 = arith.constant dense<0.000000e+00> : vector<16x128xf32>
      %22 = tpu.matmul %20, %21, %cst_19 {dimension_numbers = #tpu.dot_dimension_numbers<[1], [0], [0], [1], [0, 0, 1, 1], [], []>} : vector<16x768xbf16>, vector<768x128xbf16>, vector<16x128xf32> -> vector<16x128xf32>
      %c0_20 = arith.constant 0 : index
      %c0_21 = arith.constant 0 : index
      %23 = vector.load %arg7[%c0_20, %c0_21] : memref<1x128xf32, #tpu.memory_space<vmem>>, vector<1x128xf32>
      %24 = vector.broadcast %23 : vector<1x128xf32> to vector<16x128xf32>
      %25 = arith.addf %22, %24 : vector<16x128xf32>
      %c0_22 = arith.constant 0 : index
      %c0_23 = arith.constant 0 : index
      %26 = vector.load %arg8[%c0_22, %c0_23] : memref<16x128xf32, #tpu.memory_space<vmem>>, vector<16x128xf32>
      tpu.vector_store %arg8[%c0_22, %c0_23], %25 {strides = array<i32>} : memref<16x128xf32, #tpu.memory_space<vmem>>, vector<16x128xf32>,
    } else {
    }
    return
  }
  func.func @transform_0(%arg0: i32, %arg1: i32) -> (i32, i32) {
    %c0_i32 = arith.constant 0 : i32
    return %arg0, %arg1 : i32, i32
  }
  func.func @transform_1(%arg0: i32, %arg1: i32) -> (i32, i32) {
    %c0_i32 = arith.constant 0 : i32
    %c0_i32_0 = arith.constant 0 : i32
    return %arg1, %c0_i32 : i32, i32
  }
  func.func @transform_2(%arg0: i32, %arg1: i32) -> (i32, i32) {
    %c0_i32 = arith.constant 0 : i32
    %c0_i32_0 = arith.constant 0 : i32
    %c0_i32_1 = arith.constant 0 : i32
    return %c0_i32, %c0_i32_0 : i32, i32
  }
  func.func @transform_3(%arg0: i32, %arg1: i32) -> (i32, i32) {
    %c0_i32 = arith.constant 0 : i32
    %c0_i32_0 = arith.constant 0 : i32
    %c0_i32_1 = arith.constant 0 : i32
    return %c0_i32, %c0_i32_0 : i32, i32
  }
  func.func @transform_4(%arg0: i32, %arg1: i32) -> (i32, i32) {
    %c0_i32 = arith.constant 0 : i32
    %c0_i32_0 = arith.constant 0 : i32
    %c0_i32_1 = arith.constant 0 : i32
    return %c0_i32, %c0_i32_0 : i32, i32
  }
  func.func @transform_5(%arg0: i32, %arg1: i32) -> (i32, i32) {
    %c0_i32 = arith.constant 0 : i32
    %c0_i32_0 = arith.constant 0 : i32
    %c0_i32_1 = arith.constant 0 : i32
    return %c0_i32, %c0_i32_0 : i32, i32
  }
  func.func @transform_6(%arg0: i32, %arg1: i32) -> (i32, i32) {
    %c0_i32 = arith.constant 0 : i32
    %c0_i32_0 = arith.constant 0 : i32
    return %arg0, %c0_i32 : i32, i32
  }
}

</mosaic_0001>

<llo_original>
// kernel: cls_model_forward.1
$region0: #{cls_model_forward.1}
  #allocation0 [shape = 'u32[]', space=smem, size = 0x4, offset = 0x4, fixed_abs, tag = 'smem constant byte address 0x4 - core index']
  #allocation1 [shape = 'u32[144,128]{1,0:T(1,128)}', space=vmem, size = 0x12000, scoped, tag = 'internal scratch']
  #allocation2 [shape = 'f32[16,768]{1,0:T(8,128)}', space=vmem, size = 0xc000, scoped, tag = 'scratch operand']
  %s0 = inlined_call_operand.vmem [shape: bf16[16,128], index: 0, kind: input, shape index: {}]
  %s1 = inlined_call_operand.vmem [shape: bf16[128,768], index: 1, kind: input, shape index: {}]
  %s2 = inlined_call_operand.vmem [shape: bf16[768,768], index: 2, kind: input, shape index: {}]
  %s3 = inlined_call_operand.vmem [shape: f32[1,768], index: 3, kind: input, shape index: {}]
  %s4 = inlined_call_operand.vmem [shape: bf16[768,128], index: 4, kind: input, shape index: {}]
  %s5 = inlined_call_operand.vmem [shape: f32[1,128], index: 5, kind: input, shape index: {}]
  %s6 = inlined_call_operand.vmem [shape: f32[16,128], index: 6, kind: output, shape index: {}]
  %s7 = sld [smem:[#allocation0]]
  $region42: #{cls_model_forward.1} parent=0
    _
  %s9 = ssub.s32 1, %s7
  %s10 = scalar_select 0, %s9, %s7
  // Predicated region
  $region2: #{cls_model_forward.1} parent=0 // pred_check
    _
  $region3: #{cls_model_forward.1} parent=0 // pred_check_branch
    %12 = sbr.rel (0) target = $region5
  $region4: #{cls_model_forward.1} parent=0 // pred_region
    _
  $region5: #{cls_model_forward.1} parent=0 // pred_fallthru
    _
  // Predicated region
  $region6: #{cls_model_forward.1} parent=0 // pred_check
    _
  $region7: #{cls_model_forward.1} parent=0 // pred_check_branch
    %14 = sbr.rel (0) target = $region9
  $region8: #{cls_model_forward.1} parent=0 // pred_region
    _
  $region9: #{cls_model_forward.1} parent=0 // pred_fallthru
    _
  // Predicated region
  $region10: #{cls_model_forward.1} parent=0 // pred_check
    _
  $region11: #{cls_model_forward.1} parent=0 // pred_check_branch
    %16 = sbr.rel (0) target = $region13
  $region12: #{cls_model_forward.1} parent=0 // pred_region
    _
  $region13: #{cls_model_forward.1} parent=0 // pred_fallthru
    _
  // Predicated region
  $region14: #{cls_model_forward.1} parent=0 // pred_check
    _
  $region15: #{cls_model_forward.1} parent=0 // pred_check_branch
    %18 = sbr.rel (0) target = $region17
  $region16: #{cls_model_forward.1} parent=0 // pred_region
    _
  $region17: #{cls_model_forward.1} parent=0 // pred_fallthru
    _
  // Predicated region
  $region18: #{cls_model_forward.1} parent=0 // pred_check
    _
  $region19: #{cls_model_forward.1} parent=0 // pred_check_branch
    %20 = sbr.rel (0) target = $region21
  $region20: #{cls_model_forward.1} parent=0 // pred_region
    _
  $region21: #{cls_model_forward.1} parent=0 // pred_fallthru
    _
  // Predicated region
  $region22: #{cls_model_forward.1} parent=0 // pred_check
    _
  $region23: #{cls_model_forward.1} parent=0 // pred_check_branch
    %22 = sbr.rel (0) target = $region25
  $region24: #{cls_model_forward.1} parent=0 // pred_region
    _
  $region25: #{cls_model_forward.1} parent=0 // pred_fallthru
    _
  %p24 = scmp.eq.s32.totalorder 0, 0
  // Predicated region
  $region26: #{cls_model_forward.1} parent=0 // pred_check
    %p25 = pneg %p24
  $region27: #{cls_model_forward.1} parent=0 // pred_check_branch
    %27 = sbr.rel (%p25) target = $region29
  $region28: #{cls_model_forward.1} parent=0 // pred_region
    %28 = vst [vmem:[#allocation2] sm:$0xff] 0.0
    %29 = vst [vmem:[#allocation2 + $0x8] sm:$0xff] 0.0
    %30 = vst [vmem:[#allocation2 + $0x10] sm:$0xff] 0.0
    %31 = vst [vmem:[#allocation2 + $0x18] sm:$0xff] 0.0
    %32 = vst [vmem:[#allocation2 + $0x20] sm:$0xff] 0.0
    %33 = vst [vmem:[#allocation2 + $0x28] sm:$0xff] 0.0
    %34 = vst [vmem:[#allocation2 + $0x30] sm:$0xff] 0.0
    %35 = vst [vmem:[#allocation2 + $0x38] sm:$0xff] 0.0
    %36 = vst [vmem:[#allocation2 + $0x40] sm:$0xff] 0.0
    %37 = vst [vmem:[#allocation2 + $0x48] sm:$0xff] 0.0
    %38 = vst [vmem:[#allocation2 + $0x50] sm:$0xff] 0.0
    %39 = vst [vmem:[#allocation2 + $0x58] sm:$0xff] 0.0
  $region29: #{cls_model_forward.1} parent=0 // pred_fallthru
    _
  %v40 = vld [vmem:[#allocation2] sm:$0xff]
  %v41 = vld [vmem:[#allocation2 + $0x8] sm:$0xff]
  %v42 = vld [vmem:[#allocation2 + $0x10] sm:$0xff]
  %v43 = vld [vmem:[#allocation2 + $0x18] sm:$0xff]
  %v44 = vld [vmem:[#allocation2 + $0x20] sm:$0xff]
  %v45 = vld [vmem:[#allocation2 + $0x28] sm:$0xff]
  %v46 = vld [vmem:[#allocation2 + $0x30] sm:$0xff]
  %v47 = vld [vmem:[#allocation2 + $0x38] sm:$0xff]
  %v48 = vld [vmem:[#allocation2 + $0x40] sm:$0xff]
  %v49 = vld [vmem:[#allocation2 + $0x48] sm:$0xff]
  %v50 = vld [vmem:[#allocation2 + $0x50] sm:$0xff]
  %v51 = vld [vmem:[#allocation2 + $0x58] sm:$0xff]
  %v52 = vld [vmem:[%s0] sm:$0xf]
  %v53 = vld [vmem:[%s0 + $0x4] sm:$0xf]
  %v54 = vld [vmem:[%s1] sm:$0xff]
  %v55 = vld [vmem:[%s1 + $0x8] sm:$0xff]
  %v56 = vld [vmem:[%s1 + $0x10] sm:$0xff]
  %v57 = vld [vmem:[%s1 + $0x18] sm:$0xff]
  %v58 = vld [vmem:[%s1 + $0x20] sm:$0xff]
  %v59 = vld [vmem:[%s1 + $0x28] sm:$0xff]
  %v60 = vld [vmem:[%s1 + $0x30] sm:$0xff]
  %v61 = vld [vmem:[%s1 + $0x38] sm:$0xff]
  %v62 = vld [vmem:[%s1 + $0x40] sm:$0xff]
  %v63 = vld [vmem:[%s1 + $0x48] sm:$0xff]
  %v64 = vld [vmem:[%s1 + $0x50] sm:$0xff]
  %v65 = vld [vmem:[%s1 + $0x58] sm:$0xff]
  %v66 = vld [vmem:[%s1 + $0x60] sm:$0xff]
  %v67 = vld [vmem:[%s1 + $0x68] sm:$0xff]
  %v68 = vld [vmem:[%s1 + $0x70] sm:$0xff]
  %v69 = vld [vmem:[%s1 + $0x78] sm:$0xff]
  %v70 = vld [vmem:[%s1 + $0x80] sm:$0xff]
  %v71 = vld [vmem:[%s1 + $0x88] sm:$0xff]
  %v72 = vld [vmem:[%s1 + $0x90] sm:$0xff]
  %v73 = vld [vmem:[%s1 + $0x98] sm:$0xff]
  %v74 = vld [vmem:[%s1 + $0xa0] sm:$0xff]
  %v75 = vld [vmem:[%s1 + $0xa8] sm:$0xff]
  %v76 = vld [vmem:[%s1 + $0xb0] sm:$0xff]
  %v77 = vld [vmem:[%s1 + $0xb8] sm:$0xff]
  %v78 = vld [vmem:[%s1 + $0xc0] sm:$0xff]
  %v79 = vld [vmem:[%s1 + $0xc8] sm:$0xff]
  %v80 = vld [vmem:[%s1 + $0xd0] sm:$0xff]
  %v81 = vld [vmem:[%s1 + $0xd8] sm:$0xff]
  %v82 = vld [vmem:[%s1 + $0xe0] sm:$0xff]
  %v83 = vld [vmem:[%s1 + $0xe8] sm:$0xff]
  %v84 = vld [vmem:[%s1 + $0xf0] sm:$0xff]
  %v85 = vld [vmem:[%s1 + $0xf8] sm:$0xff]
  %v86 = vld [vmem:[%s1 + $0x100] sm:$0xff]
  %v87 = vld [vmem:[%s1 + $0x108] sm:$0xff]
  %v88 = vld [vmem:[%s1 + $0x110] sm:$0xff]
  %v89 = vld [vmem:[%s1 + $0x118] sm:$0xff]
  %v90 = vld [vmem:[%s1 + $0x120] sm:$0xff]
  %v91 = vld [vmem:[%s1 + $0x128] sm:$0xff]
  %v92 = vld [vmem:[%s1 + $0x130] sm:$0xff]
  %v93 = vld [vmem:[%s1 + $0x138] sm:$0xff]
  %v94 = vld [vmem:[%s1 + $0x140] sm:$0xff]
  %v95 = vld [vmem:[%s1 + $0x148] sm:$0xff]
  %v96 = vld [vmem:[%s1 + $0x150] sm:$0xff]
  %v97 = vld [vmem:[%s1 + $0x158] sm:$0xff]
  %v98 = vld [vmem:[%s1 + $0x160] sm:$0xff]
  %v99 = vld [vmem:[%s1 + $0x168] sm:$0xff]
  %v100 = vld [vmem:[%s1 + $0x170] sm:$0xff]
  %v101 = vld [vmem:[%s1 + $0x178] sm:$0xff]
  %v104 = vunpack.c.l.b16 %v52
  %v105 = vunpack.c.l.b16 %v53
  %v106 = vpack.c.b16 %v105, %v104
  %v156 = vunpack.c.l.b16 %v54
  %v157 = vunpack.c.h.b16 %v54
  %v158 = vunpack.c.l.b16 %v55
  %v159 = vunpack.c.h.b16 %v55
  %v160 = vunpack.c.l.b16 %v56
  %v161 = vunpack.c.h.b16 %v56
  %v162 = vunpack.c.l.b16 %v57
  %v163 = vunpack.c.h.b16 %v57
  %v164 = vunpack.c.l.b16 %v58
  %v165 = vunpack.c.h.b16 %v58
  %v166 = vunpack.c.l.b16 %v59
  %v167 = vunpack.c.h.b16 %v59
  %v168 = vunpack.c.l.b16 %v60
  %v169 = vunpack.c.h.b16 %v60
  %v170 = vunpack.c.l.b16 %v61
  %v171 = vunpack.c.h.b16 %v61
  %v172 = vunpack.c.l.b16 %v62
  %v173 = vunpack.c.h.b16 %v62
  %v174 = vunpack.c.l.b16 %v63
  %v175 = vunpack.c.h.b16 %v63
  %v176 = vunpack.c.l.b16 %v64
  %v177 = vunpack.c.h.b16 %v64
  %v178 = vunpack.c.l.b16 %v65
  %v179 = vunpack.c.h.b16 %v65
  %v180 = vunpack.c.l.b16 %v66
  %v181 = vunpack.c.h.b16 %v66
  %v182 = vunpack.c.l.b16 %v67
  %v183 = vunpack.c.h.b16 %v67
  %v184 = vunpack.c.l.b16 %v68
  %v185 = vunpack.c.h.b16 %v68
  %v186 = vunpack.c.l.b16 %v69
  %v187 = vunpack.c.h.b16 %v69
  %v188 = vunpack.c.l.b16 %v70
  %v189 = vunpack.c.h.b16 %v70
  %v190 = vunpack.c.l.b16 %v71
  %v191 = vunpack.c.h.b16 %v71
  %v192 = vunpack.c.l.b16 %v72
  %v193 = vunpack.c.h.b16 %v72
  %v194 = vunpack.c.l.b16 %v73
  %v195 = vunpack.c.h.b16 %v73
  %v196 = vunpack.c.l.b16 %v74
  %v197 = vunpack.c.h.b16 %v74
  %v198 = vunpack.c.l.b16 %v75
  %v199 = vunpack.c.h.b16 %v75
  %v200 = vunpack.c.l.b16 %v76
  %v201 = vunpack.c.h.b16 %v76
  %v202 = vunpack.c.l.b16 %v77
  %v203 = vunpack.c.h.b16 %v77
  %v204 = vunpack.c.l.b16 %v78
  %v205 = vunpack.c.h.b16 %v78
  %v206 = vunpack.c.l.b16 %v79
  %v207 = vunpack.c.h.b16 %v79
  %v208 = vunpack.c.l.b16 %v80
  %v209 = vunpack.c.h.b16 %v80
  %v210 = vunpack.c.l.b16 %v81
  %v211 = vunpack.c.h.b16 %v81
  %v212 = vunpack.c.l.b16 %v82
  %v213 = vunpack.c.h.b16 %v82
  %v214 = vunpack.c.l.b16 %v83
  %v215 = vunpack.c.h.b16 %v83
  %v216 = vunpack.c.l.b16 %v84
  %v217 = vunpack.c.h.b16 %v84
  %v218 = vunpack.c.l.b16 %v85
  %v219 = vunpack.c.h.b16 %v85
  %v220 = vunpack.c.l.b16 %v86
  %v221 = vunpack.c.h.b16 %v86
  %v222 = vunpack.c.l.b16 %v87
  %v223 = vunpack.c.h.b16 %v87
  %v224 = vunpack.c.l.b16 %v88
  %v225 = vunpack.c.h.b16 %v88
  %v226 = vunpack.c.l.b16 %v89
  %v227 = vunpack.c.h.b16 %v89
  %v228 = vunpack.c.l.b16 %v90
  %v229 = vunpack.c.h.b16 %v90
  %v230 = vunpack.c.l.b16 %v91
  %v231 = vunpack.c.h.b16 %v91
  %v232 = vunpack.c.l.b16 %v92
  %v233 = vunpack.c.h.b16 %v92
  %v234 = vunpack.c.l.b16 %v93
  %v235 = vunpack.c.h.b16 %v93
  %v236 = vunpack.c.l.b16 %v94
  %v237 = vunpack.c.h.b16 %v94
  %v238 = vunpack.c.l.b16 %v95
  %v239 = vunpack.c.h.b16 %v95
  %v240 = vunpack.c.l.b16 %v96
  %v241 = vunpack.c.h.b16 %v96
  %v242 = vunpack.c.l.b16 %v97
  %v243 = vunpack.c.h.b16 %v97
  %v244 = vunpack.c.l.b16 %v98
  %v245 = vunpack.c.h.b16 %v98
  %v246 = vunpack.c.l.b16 %v99
  %v247 = vunpack.c.h.b16 %v99
  %v248 = vunpack.c.l.b16 %v100
  %v249 = vunpack.c.h.b16 %v100
  %v250 = vunpack.c.l.b16 %v101
  %v251 = vunpack.c.h.b16 %v101
  %v252 = vpack.c.b16 %v162, %v156
  %v253 = vpack.c.b16 %v163, %v157
  %v254 = vpack.c.b16 %v164, %v158
  %v255 = vpack.c.b16 %v165, %v159
  %v256 = vpack.c.b16 %v166, %v160
  %v257 = vpack.c.b16 %v167, %v161
  %v258 = vpack.c.b16 %v174, %v168
  %v259 = vpack.c.b16 %v175, %v169
  %v260 = vpack.c.b16 %v176, %v170
  %v261 = vpack.c.b16 %v177, %v171
  %v262 = vpack.c.b16 %v178, %v172
  %v263 = vpack.c.b16 %v179, %v173
  %v264 = vpack.c.b16 %v186, %v180
  %v265 = vpack.c.b16 %v187, %v181
  %v266 = vpack.c.b16 %v188, %v182
  %v267 = vpack.c.b16 %v189, %v183
  %v268 = vpack.c.b16 %v190, %v184
  %v269 = vpack.c.b16 %v191, %v185
  %v270 = vpack.c.b16 %v198, %v192
  %v271 = vpack.c.b16 %v199, %v193
  %v272 = vpack.c.b16 %v200, %v194
  %v273 = vpack.c.b16 %v201, %v195
  %v274 = vpack.c.b16 %v202, %v196
  %v275 = vpack.c.b16 %v203, %v197
  %v276 = vpack.c.b16 %v210, %v204
  %v277 = vpack.c.b16 %v211, %v205
  %v278 = vpack.c.b16 %v212, %v206
  %v279 = vpack.c.b16 %v213, %v207
  %v280 = vpack.c.b16 %v214, %v208
  %v281 = vpack.c.b16 %v215, %v209
  %v282 = vpack.c.b16 %v222, %v216
  %v283 = vpack.c.b16 %v223, %v217
  %v284 = vpack.c.b16 %v224, %v218
  %v285 = vpack.c.b16 %v225, %v219
  %v286 = vpack.c.b16 %v226, %v220
  %v287 = vpack.c.b16 %v227, %v221
  %v288 = vpack.c.b16 %v234, %v228
  %v289 = vpack.c.b16 %v235, %v229
  %v290 = vpack.c.b16 %v236, %v230
  %v291 = vpack.c.b16 %v237, %v231
  %v292 = vpack.c.b16 %v238, %v232
  %v293 = vpack.c.b16 %v239, %v233
  %v294 = vpack.c.b16 %v246, %v240
  %v295 = vpack.c.b16 %v247, %v241
  %v296 = vpack.c.b16 %v248, %v242
  %v297 = vpack.c.b16 %v249, %v243
  %v298 = vpack.c.b16 %v250, %v244
  %v299 = vpack.c.b16 %v251, %v245
  %348 = vmatprep.subr.bf16.mxu0 %v295
  %349 = vmatpush1.bf16.msra.mxu0 %v294
  %350 = vmatprep.subr.bf16.mxu0 %v289
  %351 = vmatpush1.bf16.msra.mxu0 %v288
  %352 = vmatprep.subr.bf16.mxu0 %v283
  %353 = vmatpush1.bf16.msra.mxu0 %v282
  %354 = vmatprep.subr.bf16.mxu0 %v277
  %355 = vmatpush1.bf16.msra.mxu0 %v276
  %356 = vmatprep.subr.bf16.mxu0 %v271
  %357 = vmatpush1.bf16.msra.mxu0 %v270
  %358 = vmatprep.subr.bf16.mxu0 %v265
  %359 = vmatpush1.bf16.msra.mxu0 %v264
  %360 = vmatprep.subr.bf16.mxu0 %v259
  %361 = vmatpush1.bf16.msra.mxu0 %v258
  %362 = vmatprep.subr.bf16.mxu0 %v253
  %363 = vmatpush1.bf16.msra.mxu0 %v252
  %364 = vmatprep.subr.bf16.mxu0 0
  %365 = vmatpush2.bf16.msra.mxu0 0
  %366 = vmatprep.subr.bf16.mxu0 0
  %367 = vmatpush2.bf16.msra.mxu0 0
  %368 = vmatprep.subr.bf16.mxu0 0
  %369 = vmatpush2.bf16.msra.mxu0 0
  %370 = vmatprep.subr.bf16.mxu0 0
  %371 = vmatpush2.bf16.msra.mxu0 0
  %372 = vmatprep.subr.bf16.mxu0 0
  %373 = vmatpush2.bf16.msra.mxu0 0
  %374 = vmatprep.subr.bf16.mxu0 0
  %375 = vmatpush2.bf16.msra.mxu0 0
  %376 = vmatprep.subr.bf16.mxu0 0
  %377 = vmatpush2.bf16.msra.mxu0 0
  %378 = vmatprep.subr.bf16.mxu0 0
  %379 = vmatpush2.bf16.msra.mxu0 0
  %380 = vmatprep.mubr.bf16.mxu0 0
  %381 = vmatmul.mubr.bf16.gmra.mxu0 %v106
  %v382 = vpop.f32.mrf.mxu0
  %v383 = vadd.f32 0.0, %v382
  %v384 = vpop.f32.mrf.mxu0
  %v385 = vadd.f32 0.0, %v384
  %v386 = vpop.f32.mrf.mxu0
  %v387 = vadd.f32 0.0, %v386
  %v388 = vpop.f32.mrf.mxu0
  %v389 = vadd.f32 0.0, %v388
  %390 = vdwg.mxu0
  %391 = vmatprep.subr.bf16.mxu0 %v297
  %392 = vmatpush1.bf16.msra.mxu0 %v296
  %393 = vmatprep.subr.bf16.mxu0 %v291
  %394 = vmatpush1.bf16.msra.mxu0 %v290
  %395 = vmatprep.subr.bf16.mxu0 %v285
  %396 = vmatpush1.bf16.msra.mxu0 %v284
  %397 = vmatprep.subr.bf16.mxu0 %v279
  %398 = vmatpush1.bf16.msra.mxu0 %v278
  %399 = vmatprep.subr.bf16.mxu0 %v273
  %400 = vmatpush1.bf16.msra.mxu0 %v272
  %401 = vmatprep.subr.bf16.mxu0 %v267
  %402 = vmatpush1.bf16.msra.mxu0 %v266
  %403 = vmatprep.subr.bf16.mxu0 %v261
  %404 = vmatpush1.bf16.msra.mxu0 %v260
  %405 = vmatprep.subr.bf16.mxu0 %v255
  %406 = vmatpush1.bf16.msra.mxu0 %v254
  %407 = vmatprep.subr.bf16.mxu0 0
  %408 = vmatpush2.bf16.msra.mxu0 0
  %409 = vmatprep.subr.bf16.mxu0 0
  %410 = vmatpush2.bf16.msra.mxu0 0
  %411 = vmatprep.subr.bf16.mxu0 0
  %412 = vmatpush2.bf16.msra.mxu0 0
  %413 = vmatprep.subr.bf16.mxu0 0
  %414 = vmatpush2.bf16.msra.mxu0 0
  %415 = vmatprep.subr.bf16.mxu0 0
  %416 = vmatpush2.bf16.msra.mxu0 0
  %417 = vmatprep.subr.bf16.mxu0 0
  %418 = vmatpush2.bf16.msra.mxu0 0
  %419 = vmatprep.subr.bf16.mxu0 0
  %420 = vmatpush2.bf16.msra.mxu0 0
  %421 = vmatprep.subr.bf16.mxu0 0
  %422 = vmatpush2.bf16.msra.mxu0 0
  %423 = vmatprep.mubr.bf16.mxu0 0
  %424 = vmatmul.mubr.bf16.gmra.mxu0 %v106
  %v425 = vpop.f32.mrf.mxu0
  %v426 = vadd.f32 0.0, %v425
  %v427 = vpop.f32.mrf.mxu0
  %v428 = vadd.f32 0.0, %v427
  %v429 = vpop.f32.mrf.mxu0
  %v430 = vadd.f32 0.0, %v429
  %v431 = vpop.f32.mrf.mxu0
  %v432 = vadd.f32 0.0, %v431
  %433 = vdwg.mxu0
  %434 = vmatprep.subr.bf16.mxu0 %v299
  %435 = vmatpush1.bf16.msra.mxu0 %v298
  %436 = vmatprep.subr.bf16.mxu0 %v293
  %437 = vmatpush1.bf16.msra.mxu0 %v292
  %438 = vmatprep.subr.bf16.mxu0 %v287
  %439 = vmatpush1.bf16.msra.mxu0 %v286
  %440 = vmatprep.subr.bf16.mxu0 %v281
  %441 = vmatpush1.bf16.msra.mxu0 %v280
  %442 = vmatprep.subr.bf16.mxu0 %v275
  %443 = vmatpush1.bf16.msra.mxu0 %v274
  %444 = vmatprep.subr.bf16.mxu0 %v269
  %445 = vmatpush1.bf16.msra.mxu0 %v268
  %446 = vmatprep.subr.bf16.mxu0 %v263
  %447 = vmatpush1.bf16.msra.mxu0 %v262
  %448 = vmatprep.subr.bf16.mxu0 %v257
  %449 = vmatpush1.bf16.msra.mxu0 %v256
  %450 = vmatprep.subr.bf16.mxu0 0
  %451 = vmatpush2.bf16.msra.mxu0 0
  %452 = vmatprep.subr.bf16.mxu0 0
  %453 = vmatpush2.bf16.msra.mxu0 0
  %454 = vmatprep.subr.bf16.mxu0 0
  %455 = vmatpush2.bf16.msra.mxu0 0
  %456 = vmatprep.subr.bf16.mxu0 0
  %457 = vmatpush2.bf16.msra.mxu0 0
  %458 = vmatprep.subr.bf16.mxu0 0
  %459 = vmatpush2.bf16.msra.mxu0 0
  %460 = vmatprep.subr.bf16.mxu0 0
  %461 = vmatpush2.bf16.msra.mxu0 0
  %462 = vmatprep.subr.bf16.mxu0 0
  %463 = vmatpush2.bf16.msra.mxu0 0
  %464 = vmatprep.subr.bf16.mxu0 0
  %465 = vmatpush2.bf16.msra.mxu0 0
  %466 = vmatprep.mubr.bf16.mxu0 0
  %467 = vmatmul.mubr.bf16.gmra.mxu0 %v106
  %v468 = vpop.f32.mrf.mxu0
  %v469 = vadd.f32 0.0, %v468
  %v470 = vpop.f32.mrf.mxu0
  %v471 = vadd.f32 0.0, %v470
  %v472 = vpop.f32.mrf.mxu0
  %v473 = vadd.f32 0.0, %v472
  %v474 = vpop.f32.mrf.mxu0
  %v475 = vadd.f32 0.0, %v474
  %476 = vdwg.mxu0
  %v477 = vadd.f32 %v40, %v383
  %v478 = vadd.f32 %v41, %v385
  %v479 = vadd.f32 %v42, %v426
  %v480 = vadd.f32 %v43, %v428
  %v481 = vadd.f32 %v44, %v469
  %v482 = vadd.f32 %v45, %v471
  %v483 = vadd.f32 %v46, %v387
  %v484 = vadd.f32 %v47, %v389
  %v485 = vadd.f32 %v48, %v430
  %v486 = vadd.f32 %v49, %v432
  %v487 = vadd.f32 %v50, %v473
  %v488 = vadd.f32 %v51, %v475
  %489 = vst [vmem:[#allocation2] sm:$0xff] %v477
  %490 = vst [vmem:[#allocation2 + $0x8] sm:$0xff] %v478
  %491 = vst [vmem:[#allocation2 + $0x10] sm:$0xff] %v479
  %492 = vst [vmem:[#allocation2 + $0x18] sm:$0xff] %v480
  %493 = vst [vmem:[#allocation2 + $0x20] sm:$0xff] %v481
  %494 = vst [vmem:[#allocation2 + $0x28] sm:$0xff] %v482
  %495 = vst [vmem:[#allocation2 + $0x30] sm:$0xff] %v483
  %496 = vst [vmem:[#allocation2 + $0x38] sm:$0xff] %v484
  %497 = vst [vmem:[#allocation2 + $0x40] sm:$0xff] %v485
  %498 = vst [vmem:[#allocation2 + $0x48] sm:$0xff] %v486
  %499 = vst [vmem:[#allocation2 + $0x50] sm:$0xff] %v487
  %500 = vst [vmem:[#allocation2 + $0x58] sm:$0xff] %v488
  // Predicated region
  $region30: #{cls_model_forward.1} parent=0 // pred_check
    %p501 = pneg %p24
  $region31: #{cls_model_forward.1} parent=0 // pred_check_branch
    %503 = sbr.rel (%p501) target = $region33
  $region32: #{cls_model_forward.1} parent=0 // pred_region
    %v504 = vld [vmem:[#allocation2] sm:$0xff]
    %v505 = vld [vmem:[#allocation2 + $0x8] sm:$0xff]
    %v506 = vld [vmem:[#allocation2 + $0x10] sm:$0xff]
    %v507 = vld [vmem:[#allocation2 + $0x18] sm:$0xff]
    %v508 = vld [vmem:[#allocation2 + $0x20] sm:$0xff]
    %v509 = vld [vmem:[#allocation2 + $0x28] sm:$0xff]
    %v510 = vld [vmem:[#allocation2 + $0x30] sm:$0xff]
    %v511 = vld [vmem:[#allocation2 + $0x38] sm:$0xff]
    %v512 = vld [vmem:[#allocation2 + $0x40] sm:$0xff]
    %v513 = vld [vmem:[#allocation2 + $0x48] sm:$0xff]
    %v514 = vld [vmem:[#allocation2 + $0x50] sm:$0xff]
    %v515 = vld [vmem:[#allocation2 + $0x58] sm:$0xff]
    %v516 = vpack.c.bf16 %v510, %v504
    %v517 = vpack.c.bf16 %v511, %v505
    %v518 = vpack.c.bf16 %v512, %v506
    %v519 = vpack.c.bf16 %v513, %v507
    %v520 = vpack.c.bf16 %v514, %v508
    %v521 = vpack.c.bf16 %v515, %v509
    %v522 = vld [vmem:[%s2] sm:$0xff]
    %v523 = vld [vmem:[%s2 + $0x8] sm:$0xff]
    %v524 = vld [vmem:[%s2 + $0x10] sm:$0xff]
    %v525 = vld [vmem:[%s2 + $0x18] sm:$0xff]
    %v526 = vld [vmem:[%s2 + $0x20] sm:$0xff]
    %v527 = vld [vmem:[%s2 + $0x28] sm:$0xff]
    %v528 = vld [vmem:[%s2 + $0x30] sm:$0xff]
    %v529 = vld [vmem:[%s2 + $0x38] sm:$0xff]
    %v530 = vld [vmem:[%s2 + $0x40] sm:$0xff]
    %v531 = vld [vmem:[%s2 + $0x48] sm:$0xff]
    %v532 = vld [vmem:[%s2 + $0x50] sm:$0xff]
    %v533 = vld [vmem:[%s2 + $0x58] sm:$0xff]
    %v534 = vld [vmem:[%s2 + $0x60] sm:$0xff]
    %v535 = vld [vmem:[%s2 + $0x68] sm:$0xff]
    %v536 = vld [vmem:[%s2 + $0x70] sm:$0xff]
    %v537 = vld [vmem:[%s2 + $0x78] sm:$0xff]
    %v538 = vld [vmem:[%s2 + $0x80] sm:$0xff]
    %v539 = vld [vmem:[%s2 + $0x88] sm:$0xff]
    %v540 = vld [vmem:[%s2 + $0x90] sm:$0xff]
    %v541 = vld [vmem:[%s2 + $0x98] sm:$0xff]
    %v542 = vld [vmem:[%s2 + $0xa0] sm:$0xff]
    %v543 = vld [vmem:[%s2 + $0xa8] sm:$0xff]
    %v544 = vld [vmem:[%s2 + $0xb0] sm:$0xff]
    %v545 = vld [vmem:[%s2 + $0xb8] sm:$0xff]
    %v546 = vld [vmem:[%s2 + $0xc0] sm:$0xff]
    %v547 = vld [vmem:[%s2 + $0xc8] sm:$0xff]
    %v548 = vld [vmem:[%s2 + $0xd0] sm:$0xff]
    %v549 = vld [vmem:[%s2 + $0xd8] sm:$0xff]
    %v550 = vld [vmem:[%s2 + $0xe0] sm:$0xff]
    %v551 = vld [vmem:[%s2 + $0xe8] sm:$0xff]
    %v552 = vld [vmem:[%s2 + $0xf0] sm:$0xff]
    %v553 = vld [vmem:[%s2 + $0xf8] sm:$0xff]
    %v554 = vld [vmem:[%s2 + $0x100] sm:$0xff]
    %v555 = vld [vmem:[%s2 + $0x108] sm:$0xff]
    %v556 = vld [vmem:[%s2 + $0x110] sm:$0xff]
    %v557 = vld [vmem:[%s2 + $0x118] sm:$0xff]
    %v558 = vld [vmem:[%s2 + $0x120] sm:$0xff]
    %v559 = vld [vmem:[%s2 + $0x128] sm:$0xff]
    %v560 = vld [vmem:[%s2 + $0x130] sm:$0xff]
    %v561 = vld [vmem:[%s2 + $0x138] sm:$0xff]
    %v562 = vld [vmem:[%s2 + $0x140] sm:$0xff]
    %v563 = vld [vmem:[%s2 + $0x148] sm:$0xff]
    %v564 = vld [vmem:[%s2 + $0x150] sm:$0xff]
    %v565 = vld [vmem:[%s2 + $0x158] sm:$0xff]
    %v566 = vld [vmem:[%s2 + $0x160] sm:$0xff]
    %v567 = vld [vmem:[%s2 + $0x168] sm:$0xff]
    %v568 = vld [vmem:[%s2 + $0x170] sm:$0xff]
    %v569 = vld [vmem:[%s2 + $0x178] sm:$0xff]
    %v570 = vld [vmem:[%s2 + $0x180] sm:$0xff]
    %v571 = vld [vmem:[%s2 + $0x188] sm:$0xff]
    %v572 = vld [vmem:[%s2 + $0x190] sm:$0xff]
    %v573 = vld [vmem:[%s2 + $0x198] sm:$0xff]
    %v574 = vld [vmem:[%s2 + $0x1a0] sm:$0xff]
    %v575 = vld [vmem:[%s2 + $0x1a8] sm:$0xff]
    %v576 = vld [vmem:[%s2 + $0x1b0] sm:$0xff]
    %v577 = vld [vmem:[%s2 + $0x1b8] sm:$0xff]
    %v578 = vld [vmem:[%s2 + $0x1c0] sm:$0xff]
    %v579 = vld [vmem:[%s2 + $0x1c8] sm:$0xff]
    %v580 = vld [vmem:[%s2 + $0x1d0] sm:$0xff]
    %v581 = vld [vmem:[%s2 + $0x1d8] sm:$0xff]
    %v582 = vld [vmem:[%s2 + $0x1e0] sm:$0xff]
    %v583 = vld [vmem:[%s2 + $0x1e8] sm:$0xff]
    %v584 = vld [vmem:[%s2 + $0x1f0] sm:$0xff]
    %v585 = vld [vmem:[%s2 + $0x1f8] sm:$0xff]
    %v586 = vld [vmem:[%s2 + $0x200] sm:$0xff]
    %v587 = vld [vmem:[%s2 + $0x208] sm:$0xff]
    %v588 = vld [vmem:[%s2 + $0x210] sm:$0xff]
    %v589 = vld [vmem:[%s2 + $0x218] sm:$0xff]
    %v590 = vld [vmem:[%s2 + $0x220] sm:$0xff]
    %v591 = vld [vmem:[%s2 + $0x228] sm:$0xff]
    %v592 = vld [vmem:[%s2 + $0x230] sm:$0xff]
    %v593 = vld [vmem:[%s2 + $0x238] sm:$0xff]
    %v594 = vld [vmem:[%s2 + $0x240] sm:$0xff]
    %v595 = vld [vmem:[%s2 + $0x248] sm:$0xff]
    %v596 = vld [vmem:[%s2 + $0x250] sm:$0xff]
    %v597 = vld [vmem:[%s2 + $0x258] sm:$0xff]
    %v598 = vld [vmem:[%s2 + $0x260] sm:$0xff]
    %v599 = vld [vmem:[%s2 + $0x268] sm:$0xff]
    %v600 = vld [vmem:[%s2 + $0x270] sm:$0xff]
    %v601 = vld [vmem:[%s2 + $0x278] sm:$0xff]
    %v602 = vld [vmem:[%s2 + $0x280] sm:$0xff]
    %v603 = vld [vmem:[%s2 + $0x288] sm:$0xff]
    %v604 = vld [vmem:[%s2 + $0x290] sm:$0xff]
    %v605 = vld [vmem:[%s2 + $0x298] sm:$0xff]
    %v606 = vld [vmem:[%s2 + $0x2a0] sm:$0xff]
    %v607 = vld [vmem:[%s2 + $0x2a8] sm:$0xff]
    %v608 = vld [vmem:[%s2 + $0x2b0] sm:$0xff]
    %v609 = vld [vmem:[%s2 + $0x2b8] sm:$0xff]
    %v610 = vld [vmem:[%s2 + $0x2c0] sm:$0xff]
    %v611 = vld [vmem:[%s2 + $0x2c8] sm:$0xff]
    %v612 = vld [vmem:[%s2 + $0x2d0] sm:$0xff]
    %v613 = vld [vmem:[%s2 + $0x2d8] sm:$0xff]
    %v614 = vld [vmem:[%s2 + $0x2e0] sm:$0xff]
    %v615 = vld [vmem:[%s2 + $0x2e8] sm:$0xff]
    %v616 = vld [vmem:[%s2 + $0x2f0] sm:$0xff]
    %v617 = vld [vmem:[%s2 + $0x2f8] sm:$0xff]
    %v618 = vld [vmem:[%s2 + $0x300] sm:$0xff]
    %v619 = vld [vmem:[%s2 + $0x308] sm:$0xff]
    %v620 = vld [vmem:[%s2 + $0x310] sm:$0xff]
    %v621 = vld [vmem:[%s2 + $0x318] sm:$0xff]
    %v622 = vld [vmem:[%s2 + $0x320] sm:$0xff]
    %v623 = vld [vmem:[%s2 + $0x328] sm:$0xff]
    %v624 = vld [vmem:[%s2 + $0x330] sm:$0xff]
    %v625 = vld [vmem:[%s2 + $0x338] sm:$0xff]
    %v626 = vld [vmem:[%s2 + $0x340] sm:$0xff]
    %v627 = vld [vmem:[%s2 + $0x348] sm:$0xff]
    %v628 = vld [vmem:[%s2 + $0x350] sm:$0xff]
    %v629 = vld [vmem:[%s2 + $0x358] sm:$0xff]
    %v630 = vld [vmem:[%s2 + $0x360] sm:$0xff]
    %v631 = vld [vmem:[%s2 + $0x368] sm:$0xff]
    %v632 = vld [vmem:[%s2 + $0x370] sm:$0xff]
    %v633 = vld [vmem:[%s2 + $0x378] sm:$0xff]
    %v634 = vld [vmem:[%s2 + $0x380] sm:$0xff]
    %v635 = vld [vmem:[%s2 + $0x388] sm:$0xff]
    %v636 = vld [vmem:[%s2 + $0x390] sm:$0xff]
    %v637 = vld [vmem:[%s2 + $0x398] sm:$0xff]
    %v638 = vld [vmem:[%s2 + $0x3a0] sm:$0xff]
    %v639 = vld [vmem:[%s2 + $0x3a8] sm:$0xff]
    %v640 = vld [vmem:[%s2 + $0x3b0] sm:$0xff]
    %v641 = vld [vmem:[%s2 + $0x3b8] sm:$0xff]
    %v642 = vld [vmem:[%s2 + $0x3c0] sm:$0xff]
    %v643 = vld [vmem:[%s2 + $0x3c8] sm:$0xff]
    %v644 = vld [vmem:[%s2 + $0x3d0] sm:$0xff]
    %v645 = vld [vmem:[%s2 + $0x3d8] sm:$0xff]
    %v646 = vld [vmem:[%s2 + $0x3e0] sm:$0xff]
    %v647 = vld [vmem:[%s2 + $0x3e8] sm:$0xff]
    %v648 = vld [vmem:[%s2 + $0x3f0] sm:$0xff]
    %v649 = vld [vmem:[%s2 + $0x3f8] sm:$0xff]
    %v650 = vld [vmem:[%s2 + $0x400] sm:$0xff]
    %v651 = vld [vmem:[%s2 + $0x408] sm:$0xff]
    %v652 = vld [vmem:[%s2 + $0x410] sm:$0xff]
    %v653 = vld [vmem:[%s2 + $0x418] sm:$0xff]
    %v654 = vld [vmem:[%s2 + $0x420] sm:$0xff]
    %v655 = vld [vmem:[%s2 + $0x428] sm:$0xff]
    %v656 = vld [vmem:[%s2 + $0x430] sm:$0xff]
    %v657 = vld [vmem:[%s2 + $0x438] sm:$0xff]
    %v658 = vld [vmem:[%s2 + $0x440] sm:$0xff]
    %v659 = vld [vmem:[%s2 + $0x448] sm:$0xff]
    %v660 = vld [vmem:[%s2 + $0x450] sm:$0xff]
    %v661 = vld [vmem:[%s2 + $0x458] sm:$0xff]
    %v662 = vld [vmem:[%s2 + $0x460] sm:$0xff]
    %v663 = vld [vmem:[%s2 + $0x468] sm:$0xff]
    %v664 = vld [vmem:[%s2 + $0x470] sm:$0xff]
    %v665 = vld [vmem:[%s2 + $0x478] sm:$0xff]
    %v666 = vld [vmem:[%s2 + $0x480] sm:$0xff]
    %v667 = vld [vmem:[%s2 + $0x488] sm:$0xff]
    %v668 = vld [vmem:[%s2 + $0x490] sm:$0xff]
    %v669 = vld [vmem:[%s2 + $0x498] sm:$0xff]
    %v670 = vld [vmem:[%s2 + $0x4a0] sm:$0xff]
    %v671 = vld [vmem:[%s2 + $0x4a8] sm:$0xff]
    %v672 = vld [vmem:[%s2 + $0x4b0] sm:$0xff]
    %v673 = vld [vmem:[%s2 + $0x4b8] sm:$0xff]
    %v674 = vld [vmem:[%s2 + $0x4c0] sm:$0xff]
    %v675 = vld [vmem:[%s2 + $0x4c8] sm:$0xff]
    %v676 = vld [vmem:[%s2 + $0x4d0] sm:$0xff]
    %v677 = vld [vmem:[%s2 + $0x4d8] sm:$0xff]
    %v678 = vld [vmem:[%s2 + $0x4e0] sm:$0xff]
    %v679 = vld [vmem:[%s2 + $0x4e8] sm:$0xff]
    %v680 = vld [vmem:[%s2 + $0x4f0] sm:$0xff]
    %v681 = vld [vmem:[%s2 + $0x4f8] sm:$0xff]
    %v682 = vld [vmem:[%s2 + $0x500] sm:$0xff]
    %v683 = vld [vmem:[%s2 + $0x508] sm:$0xff]
    %v684 = vld [vmem:[%s2 + $0x510] sm:$0xff]
    %v685 = vld [vmem:[%s2 + $0x518] sm:$0xff]
    %v686 = vld [vmem:[%s2 + $0x520] sm:$0xff]
    %v687 = vld [vmem:[%s2 + $0x528] sm:$0xff]
    %v688 = vld [vmem:[%s2 + $0x530] sm:$0xff]
    %v689 = vld [vmem:[%s2 + $0x538] sm:$0xff]
    %v690 = vld [vmem:[%s2 + $0x540] sm:$0xff]
    %v691 = vld [vmem:[%s2 + $0x548] sm:$0xff]
    %v692 = vld [vmem:[%s2 + $0x550] sm:$0xff]
    %v693 = vld [vmem:[%s2 + $0x558] sm:$0xff]
    %v694 = vld [vmem:[%s2 + $0x560] sm:$0xff]
    %v695 = vld [vmem:[%s2 + $0x568] sm:$0xff]
    %v696 = vld [vmem:[%s2 + $0x570] sm:$0xff]
    %v697 = vld [vmem:[%s2 + $0x578] sm:$0xff]
    %v698 = vld [vmem:[%s2 + $0x580] sm:$0xff]
    %v699 = vld [vmem:[%s2 + $0x588] sm:$0xff]
    %v700 = vld [vmem:[%s2 + $0x590] sm:$0xff]
    %v701 = vld [vmem:[%s2 + $0x598] sm:$0xff]
    %v702 = vld [vmem:[%s2 + $0x5a0] sm:$0xff]
    %v703 = vld [vmem:[%s2 + $0x5a8] sm:$0xff]
    %v704 = vld [vmem:[%s2 + $0x5b0] sm:$0xff]
    %v705 = vld [vmem:[%s2 + $0x5b8] sm:$0xff]
    %v706 = vld [vmem:[%s2 + $0x5c0] sm:$0xff]
    %v707 = vld [vmem:[%s2 + $0x5c8] sm:$0xff]
    %v708 = vld [vmem:[%s2 + $0x5d0] sm:$0xff]
    %v709 = vld [vmem:[%s2 + $0x5d8] sm:$0xff]
    %v710 = vld [vmem:[%s2 + $0x5e0] sm:$0xff]
    %v711 = vld [vmem:[%s2 + $0x5e8] sm:$0xff]
    %v712 = vld [vmem:[%s2 + $0x5f0] sm:$0xff]
    %v713 = vld [vmem:[%s2 + $0x5f8] sm:$0xff]
    %v714 = vld [vmem:[%s2 + $0x600] sm:$0xff]
    %v715 = vld [vmem:[%s2 + $0x608] sm:$0xff]
    %v716 = vld [vmem:[%s2 + $0x610] sm:$0xff]
    %v717 = vld [vmem:[%s2 + $0x618] sm:$0xff]
    %v718 = vld [vmem:[%s2 + $0x620] sm:$0xff]
    %v719 = vld [vmem:[%s2 + $0x628] sm:$0xff]
    %v720 = vld [vmem:[%s2 + $0x630] sm:$0xff]
    %v721 = vld [vmem:[%s2 + $0x638] sm:$0xff]
    %v722 = vld [vmem:[%s2 + $0x640] sm:$0xff]
    %v723 = vld [vmem:[%s2 + $0x648] sm:$0xff]
    %v724 = vld [vmem:[%s2 + $0x650] sm:$0xff]
    %v725 = vld [vmem:[%s2 + $0x658] sm:$0xff]
    %v726 = vld [vmem:[%s2 + $0x660] sm:$0xff]
    %v727 = vld [vmem:[%s2 + $0x668] sm:$0xff]
    %v728 = vld [vmem:[%s2 + $0x670] sm:$0xff]
    %v729 = vld [vmem:[%s2 + $0x678] sm:$0xff]
    %v730 = vld [vmem:[%s2 + $0x680] sm:$0xff]
    %v731 = vld [vmem:[%s2 + $0x688] sm:$0xff]
    %v732 = vld [vmem:[%s2 + $0x690] sm:$0xff]
    %v733 = vld [vmem:[%s2 + $0x698] sm:$0xff]
    %v734 = vld [vmem:[%s2 + $0x6a0] sm:$0xff]
    %v735 = vld [vmem:[%s2 + $0x6a8] sm:$0xff]
    %v736 = vld [vmem:[%s2 + $0x6b0] sm:$0xff]
    %v737 = vld [vmem:[%s2 + $0x6b8] sm:$0xff]
    %v738 = vld [vmem:[%s2 + $0x6c0] sm:$0xff]
    %v739 = vld [vmem:[%s2 + $0x6c8] sm:$0xff]
    %v740 = vld [vmem:[%s2 + $0x6d0] sm:$0xff]
    %v741 = vld [vmem:[%s2 + $0x6d8] sm:$0xff]
    %v742 = vld [vmem:[%s2 + $0x6e0] sm:$0xff]
    %v743 = vld [vmem:[%s2 + $0x6e8] sm:$0xff]
    %v744 = vld [vmem:[%s2 + $0x6f0] sm:$0xff]
    %v745 = vld [vmem:[%s2 + $0x6f8] sm:$0xff]
    %v746 = vld [vmem:[%s2 + $0x700] sm:$0xff]
    %v747 = vld [vmem:[%s2 + $0x708] sm:$0xff]
    %v748 = vld [vmem:[%s2 + $0x710] sm:$0xff]
    %v749 = vld [vmem:[%s2 + $0x718] sm:$0xff]
    %v750 = vld [vmem:[%s2 + $0x720] sm:$0xff]
    %v751 = vld [vmem:[%s2 + $0x728] sm:$0xff]
    %v752 = vld [vmem:[%s2 + $0x730] sm:$0xff]
    %v753 = vld [vmem:[%s2 + $0x738] sm:$0xff]
    %v754 = vld [vmem:[%s2 + $0x740] sm:$0xff]
    %v755 = vld [vmem:[%s2 + $0x748] sm:$0xff]
    %v756 = vld [vmem:[%s2 + $0x750] sm:$0xff]
    %v757 = vld [vmem:[%s2 + $0x758] sm:$0xff]
    %v758 = vld [vmem:[%s2 + $0x760] sm:$0xff]
    %v759 = vld [vmem:[%s2 + $0x768] sm:$0xff]
    %v760 = vld [vmem:[%s2 + $0x770] sm:$0xff]
    %v761 = vld [vmem:[%s2 + $0x778] sm:$0xff]
    %v762 = vld [vmem:[%s2 + $0x780] sm:$0xff]
    %v763 = vld [vmem:[%s2 + $0x788] sm:$0xff]
    %v764 = vld [vmem:[%s2 + $0x790] sm:$0xff]
    %v765 = vld [vmem:[%s2 + $0x798] sm:$0xff]
    %v766 = vld [vmem:[%s2 + $0x7a0] sm:$0xff]
    %v767 = vld [vmem:[%s2 + $0x7a8] sm:$0xff]
    %v768 = vld [vmem:[%s2 + $0x7b0] sm:$0xff]
    %v769 = vld [vmem:[%s2 + $0x7b8] sm:$0xff]
    %v770 = vld [vmem:[%s2 + $0x7c0] sm:$0xff]
    %v771 = vld [vmem:[%s2 + $0x7c8] sm:$0xff]
    %v772 = vld [vmem:[%s2 + $0x7d0] sm:$0xff]
    %v773 = vld [vmem:[%s2 + $0x7d8] sm:$0xff]
    %v774 = vld [vmem:[%s2 + $0x7e0] sm:$0xff]
    %v775 = vld [vmem:[%s2 + $0x7e8] sm:$0xff]
    %v776 = vld [vmem:[%s2 + $0x7f0] sm:$0xff]
    %v777 = vld [vmem:[%s2 + $0x7f8] sm:$0xff]
    %v778 = vld [vmem:[%s2 + $0x800] sm:$0xff]
    %v779 = vld [vmem:[%s2 + $0x808] sm:$0xff]
    %v780 = vld [vmem:[%s2 + $0x810] sm:$0xff]
    %v781 = vld [vmem:[%s2 + $0x818] sm:$0xff]
    %v782 = vld [vmem:[%s2 + $0x820] sm:$0xff]
    %v783 = vld [vmem:[%s2 + $0x828] sm:$0xff]
    %v784 = vld [vmem:[%s2 + $0x830] sm:$0xff]
    %v785 = vld [vmem:[%s2 + $0x838] sm:$0xff]
    %v786 = vld [vmem:[%s2 + $0x840] sm:$0xff]
    %v787 = vld [vmem:[%s2 + $0x848] sm:$0xff]
    %v788 = vld [vmem:[%s2 + $0x850] sm:$0xff]
    %v789 = vld [vmem:[%s2 + $0x858] sm:$0xff]
    %v790 = vld [vmem:[%s2 + $0x860] sm:$0xff]
    %v791 = vld [vmem:[%s2 + $0x868] sm:$0xff]
    %v792 = vld [vmem:[%s2 + $0x870] sm:$0xff]
    %v793 = vld [vmem:[%s2 + $0x878] sm:$0xff]
    %v794 = vld [vmem:[%s2 + $0x880] sm:$0xff]
    %v795 = vld [vmem:[%s2 + $0x888] sm:$0xff]
    %v796 = vld [vmem:[%s2 + $0x890] sm:$0xff]
    %v797 = vld [vmem:[%s2 + $0x898] sm:$0xff]
    %v798 = vld [vmem:[%s2 + $0x8a0] sm:$0xff]
    %v799 = vld [vmem:[%s2 + $0x8a8] sm:$0xff]
    %v800 = vld [vmem:[%s2 + $0x8b0] sm:$0xff]
    %v801 = vld [vmem:[%s2 + $0x8b8] sm:$0xff]
    %v802 = vld [vmem:[%s2 + $0x8c0] sm:$0xff]
    %v803 = vld [vmem:[%s2 + $0x8c8] sm:$0xff]
    %v804 = vld [vmem:[%s2 + $0x8d0] sm:$0xff]
    %v805 = vld [vmem:[%s2 + $0x8d8] sm:$0xff]
    %v806 = vld [vmem:[%s2 + $0x8e0] sm:$0xff]
    %v807 = vld [vmem:[%s2 + $0x8e8] sm:$0xff]
    %v808 = vld [vmem:[%s2 + $0x8f0] sm:$0xff]
    %v809 = vld [vmem:[%s2 + $0x8f8] sm:$0xff]
    %v810 = vld [vmem:[%s3] sm:$0x3f]
    %v812 = vlaneseq
    %v813 = vshrl.u32 %v812, 7
    %v814 = vsub.s32 0, %v813
    %v815 = vrot.slane %v810, %v814
    %v816 = vlaneseq
    %v817 = vshrl.u32 %v816, 7
    %v818 = vsub.s32 1, %v817
    %v819 = vrot.slane %v810, %v818
    %v820 = vlaneseq
    %v821 = vshrl.u32 %v820, 7
    %v822 = vsub.s32 2, %v821
    %v823 = vrot.slane %v810, %v822
    %v824 = vlaneseq
    %v825 = vshrl.u32 %v824, 7
    %v826 = vsub.s32 3, %v825
    %v827 = vrot.slane %v810, %v826
    %v828 = vlaneseq
    %v829 = vshrl.u32 %v828, 7
    %v830 = vsub.s32 4, %v829
    %v831 = vrot.slane %v810, %v830
    %v832 = vlaneseq
    %v833 = vshrl.u32 %v832, 7
    %v834 = vsub.s32 5, %v833
    %v835 = vrot.slane %v810, %v834
    %v1130 = vunpack.c.l.b16 %v522
    %v1131 = vunpack.c.h.b16 %v522
    %v1132 = vunpack.c.l.b16 %v523
    %v1133 = vunpack.c.h.b16 %v523
    %v1134 = vunpack.c.l.b16 %v524
    %v1135 = vunpack.c.h.b16 %v524
    %v1136 = vunpack.c.l.b16 %v525
    %v1137 = vunpack.c.h.b16 %v525
    %v1138 = vunpack.c.l.b16 %v526
    %v1139 = vunpack.c.h.b16 %v526
    %v1140 = vunpack.c.l.b16 %v527
    %v1141 = vunpack.c.h.b16 %v527
    %v1142 = vunpack.c.l.b16 %v528
    %v1143 = vunpack.c.h.b16 %v528
    %v1144 = vunpack.c.l.b16 %v529
    %v1145 = vunpack.c.h.b16 %v529
    %v1146 = vunpack.c.l.b16 %v530
    %v1147 = vunpack.c.h.b16 %v530
    %v1148 = vunpack.c.l.b16 %v531
    %v1149 = vunpack.c.h.b16 %v531
    %v1150 = vunpack.c.l.b16 %v532
    %v1151 = vunpack.c.h.b16 %v532
    %v1152 = vunpack.c.l.b16 %v533
    %v1153 = vunpack.c.h.b16 %v533
    %v1154 = vunpack.c.l.b16 %v534
    %v1155 = vunpack.c.h.b16 %v534
    %v1156 = vunpack.c.l.b16 %v535
    %v1157 = vunpack.c.h.b16 %v535
    %v1158 = vunpack.c.l.b16 %v536
    %v1159 = vunpack.c.h.b16 %v536
    %v1160 = vunpack.c.l.b16 %v537
    %v1161 = vunpack.c.h.b16 %v537
    %v1162 = vunpack.c.l.b16 %v538
    %v1163 = vunpack.c.h.b16 %v538
    %v1164 = vunpack.c.l.b16 %v539
    %v1165 = vunpack.c.h.b16 %v539
    %v1166 = vunpack.c.l.b16 %v540
    %v1167 = vunpack.c.h.b16 %v540
    %v1168 = vunpack.c.l.b16 %v541
    %v1169 = vunpack.c.h.b16 %v541
    %v1170 = vunpack.c.l.b16 %v542
    %v1171 = vunpack.c.h.b16 %v542
    %v1172 = vunpack.c.l.b16 %v543
    %v1173 = vunpack.c.h.b16 %v543
    %v1174 = vunpack.c.l.b16 %v544
    %v1175 = vunpack.c.h.b16 %v544
    %v1176 = vunpack.c.l.b16 %v545
    %v1177 = vunpack.c.h.b16 %v545
    %v1178 = vunpack.c.l.b16 %v546
    %v1179 = vunpack.c.h.b16 %v546
    %v1180 = vunpack.c.l.b16 %v547
    %v1181 = vunpack.c.h.b16 %v547
    %v1182 = vunpack.c.l.b16 %v548
    %v1183 = vunpack.c.h.b16 %v548
    %v1184 = vunpack.c.l.b16 %v549
    %v1185 = vunpack.c.h.b16 %v549
    %v1186 = vunpack.c.l.b16 %v550
    %v1187 = vunpack.c.h.b16 %v550
    %v1188 = vunpack.c.l.b16 %v551
    %v1189 = vunpack.c.h.b16 %v551
    %v1190 = vunpack.c.l.b16 %v552
    %v1191 = vunpack.c.h.b16 %v552
    %v1192 = vunpack.c.l.b16 %v553
    %v1193 = vunpack.c.h.b16 %v553
    %v1194 = vunpack.c.l.b16 %v554
    %v1195 = vunpack.c.h.b16 %v554
    %v1196 = vunpack.c.l.b16 %v555
    %v1197 = vunpack.c.h.b16 %v555
    %v1198 = vunpack.c.l.b16 %v556
    %v1199 = vunpack.c.h.b16 %v556
    %v1200 = vunpack.c.l.b16 %v557
    %v1201 = vunpack.c.h.b16 %v557
    %v1202 = vunpack.c.l.b16 %v558
    %v1203 = vunpack.c.h.b16 %v558
    %v1204 = vunpack.c.l.b16 %v559
    %v1205 = vunpack.c.h.b16 %v559
    %v1206 = vunpack.c.l.b16 %v560
    %v1207 = vunpack.c.h.b16 %v560
    %v1208 = vunpack.c.l.b16 %v561
    %v1209 = vunpack.c.h.b16 %v561
    %v1210 = vunpack.c.l.b16 %v562
    %v1211 = vunpack.c.h.b16 %v562
    %v1212 = vunpack.c.l.b16 %v563
    %v1213 = vunpack.c.h.b16 %v563
    %v1214 = vunpack.c.l.b16 %v564
    %v1215 = vunpack.c.h.b16 %v564
    %v1216 = vunpack.c.l.b16 %v565
    %v1217 = vunpack.c.h.b16 %v565
    %v1218 = vunpack.c.l.b16 %v566
    %v1219 = vunpack.c.h.b16 %v566
    %v1220 = vunpack.c.l.b16 %v567
    %v1221 = vunpack.c.h.b16 %v567
    %v1222 = vunpack.c.l.b16 %v568
    %v1223 = vunpack.c.h.b16 %v568
    %v1224 = vunpack.c.l.b16 %v569
    %v1225 = vunpack.c.h.b16 %v569
    %v1226 = vunpack.c.l.b16 %v570
    %v1227 = vunpack.c.h.b16 %v570
    %v1228 = vunpack.c.l.b16 %v571
    %v1229 = vunpack.c.h.b16 %v571
    %v1230 = vunpack.c.l.b16 %v572
    %v1231 = vunpack.c.h.b16 %v572
    %v1232 = vunpack.c.l.b16 %v573
    %v1233 = vunpack.c.h.b16 %v573
    %v1234 = vunpack.c.l.b16 %v574
    %v1235 = vunpack.c.h.b16 %v574
    %v1236 = vunpack.c.l.b16 %v575
    %v1237 = vunpack.c.h.b16 %v575
    %v1238 = vunpack.c.l.b16 %v576
    %v1239 = vunpack.c.h.b16 %v576
    %v1240 = vunpack.c.l.b16 %v577
    %v1241 = vunpack.c.h.b16 %v577
    %v1242 = vunpack.c.l.b16 %v578
    %v1243 = vunpack.c.h.b16 %v578
    %v1244 = vunpack.c.l.b16 %v579
    %v1245 = vunpack.c.h.b16 %v579
    %v1246 = vunpack.c.l.b16 %v580
    %v1247 = vunpack.c.h.b16 %v580
    %v1248 = vunpack.c.l.b16 %v581
    %v1249 = vunpack.c.h.b16 %v581
    %v1250 = vunpack.c.l.b16 %v582
    %v1251 = vunpack.c.h.b16 %v582
    %v1252 = vunpack.c.l.b16 %v583
    %v1253 = vunpack.c.h.b16 %v583
    %v1254 = vunpack.c.l.b16 %v584
    %v1255 = vunpack.c.h.b16 %v584
    %v1256 = vunpack.c.l.b16 %v585
    %v1257 = vunpack.c.h.b16 %v585
    %v1258 = vunpack.c.l.b16 %v586
    %v1259 = vunpack.c.h.b16 %v586
    %v1260 = vunpack.c.l.b16 %v587
    %v1261 = vunpack.c.h.b16 %v587
    %v1262 = vunpack.c.l.b16 %v588
    %v1263 = vunpack.c.h.b16 %v588
    %v1264 = vunpack.c.l.b16 %v589
    %v1265 = vunpack.c.h.b16 %v589
    %v1266 = vunpack.c.l.b16 %v590
    %v1267 = vunpack.c.h.b16 %v590
    %v1268 = vunpack.c.l.b16 %v591
    %v1269 = vunpack.c.h.b16 %v591
    %v1270 = vunpack.c.l.b16 %v592
    %v1271 = vunpack.c.h.b16 %v592
    %v1272 = vunpack.c.l.b16 %v593
    %v1273 = vunpack.c.h.b16 %v593
    %v1274 = vunpack.c.l.b16 %v594
    %v1275 = vunpack.c.h.b16 %v594
    %v1276 = vunpack.c.l.b16 %v595
    %v1277 = vunpack.c.h.b16 %v595
    %v1278 = vunpack.c.l.b16 %v596
    %v1279 = vunpack.c.h.b16 %v596
    %v1280 = vunpack.c.l.b16 %v597
    %v1281 = vunpack.c.h.b16 %v597
    %v1282 = vunpack.c.l.b16 %v598
    %v1283 = vunpack.c.h.b16 %v598
    %v1284 = vunpack.c.l.b16 %v599
    %v1285 = vunpack.c.h.b16 %v599
    %v1286 = vunpack.c.l.b16 %v600
    %v1287 = vunpack.c.h.b16 %v600
    %v1288 = vunpack.c.l.b16 %v601
    %v1289 = vunpack.c.h.b16 %v601
    %v1290 = vunpack.c.l.b16 %v602
    %v1291 = vunpack.c.h.b16 %v602
    %v1292 = vunpack.c.l.b16 %v603
    %v1293 = vunpack.c.h.b16 %v603
    %v1294 = vunpack.c.l.b16 %v604
    %v1295 = vunpack.c.h.b16 %v604
    %v1296 = vunpack.c.l.b16 %v605
    %v1297 = vunpack.c.h.b16 %v605
    %v1298 = vunpack.c.l.b16 %v606
    %v1299 = vunpack.c.h.b16 %v606
    %v1300 = vunpack.c.l.b16 %v607
    %v1301 = vunpack.c.h.b16 %v607
    %v1302 = vunpack.c.l.b16 %v608
    %v1303 = vunpack.c.h.b16 %v608
    %v1304 = vunpack.c.l.b16 %v609
    %v1305 = vunpack.c.h.b16 %v609
    %v1306 = vunpack.c.l.b16 %v610
    %v1307 = vunpack.c.h.b16 %v610
    %v1308 = vunpack.c.l.b16 %v611
    %v1309 = vunpack.c.h.b16 %v611
    %v1310 = vunpack.c.l.b16 %v612
    %v1311 = vunpack.c.h.b16 %v612
    %v1312 = vunpack.c.l.b16 %v613
    %v1313 = vunpack.c.h.b16 %v613
    %v1314 = vunpack.c.l.b16 %v614
    %v1315 = vunpack.c.h.b16 %v614
    %v1316 = vunpack.c.l.b16 %v615
    %v1317 = vunpack.c.h.b16 %v615
    %v1318 = vunpack.c.l.b16 %v616
    %v1319 = vunpack.c.h.b16 %v616
    %v1320 = vunpack.c.l.b16 %v617
    %v1321 = vunpack.c.h.b16 %v617
    %v1322 = vunpack.c.l.b16 %v618
    %v1323 = vunpack.c.h.b16 %v618
    %v1324 = vunpack.c.l.b16 %v619
    %v1325 = vunpack.c.h.b16 %v619
    %v1326 = vunpack.c.l.b16 %v620
    %v1327 = vunpack.c.h.b16 %v620
    %v1328 = vunpack.c.l.b16 %v621
    %v1329 = vunpack.c.h.b16 %v621
    %v1330 = vunpack.c.l.b16 %v622
    %v1331 = vunpack.c.h.b16 %v622
    %v1332 = vunpack.c.l.b16 %v623
    %v1333 = vunpack.c.h.b16 %v623
    %v1334 = vunpack.c.l.b16 %v624
    %v1335 = vunpack.c.h.b16 %v624
    %v1336 = vunpack.c.l.b16 %v625
    %v1337 = vunpack.c.h.b16 %v625
    %v1338 = vunpack.c.l.b16 %v626
    %v1339 = vunpack.c.h.b16 %v626
    %v1340 = vunpack.c.l.b16 %v627
    %v1341 = vunpack.c.h.b16 %v627
    %v1342 = vunpack.c.l.b16 %v628
    %v1343 = vunpack.c.h.b16 %v628
    %v1344 = vunpack.c.l.b16 %v629
    %v1345 = vunpack.c.h.b16 %v629
    %v1346 = vunpack.c.l.b16 %v630
    %v1347 = vunpack.c.h.b16 %v630
    %v1348 = vunpack.c.l.b16 %v631
    %v1349 = vunpack.c.h.b16 %v631
    %v1350 = vunpack.c.l.b16 %v632
    %v1351 = vunpack.c.h.b16 %v632
    %v1352 = vunpack.c.l.b16 %v633
    %v1353 = vunpack.c.h.b16 %v633
    %v1354 = vunpack.c.l.b16 %v634
    %v1355 = vunpack.c.h.b16 %v634
    %v1356 = vunpack.c.l.b16 %v635
    %v1357 = vunpack.c.h.b16 %v635
    %v1358 = vunpack.c.l.b16 %v636
    %v1359 = vunpack.c.h.b16 %v636
    %v1360 = vunpack.c.l.b16 %v637
    %v1361 = vunpack.c.h.b16 %v637
    %v1362 = vunpack.c.l.b16 %v638
    %v1363 = vunpack.c.h.b16 %v638
    %v1364 = vunpack.c.l.b16 %v639
    %v1365 = vunpack.c.h.b16 %v639
    %v1366 = vunpack.c.l.b16 %v640
    %v1367 = vunpack.c.h.b16 %v640
    %v1368 = vunpack.c.l.b16 %v641
    %v1369 = vunpack.c.h.b16 %v641
    %v1370 = vunpack.c.l.b16 %v642
    %v1371 = vunpack.c.h.b16 %v642
    %v1372 = vunpack.c.l.b16 %v643
    %v1373 = vunpack.c.h.b16 %v643
    %v1374 = vunpack.c.l.b16 %v644
    %v1375 = vunpack.c.h.b16 %v644
    %v1376 = vunpack.c.l.b16 %v645
    %v1377 = vunpack.c.h.b16 %v645
    %v1378 = vunpack.c.l.b16 %v646
    %v1379 = vunpack.c.h.b16 %v646
    %v1380 = vunpack.c.l.b16 %v647
    %v1381 = vunpack.c.h.b16 %v647
    %v1382 = vunpack.c.l.b16 %v648
    %v1383 = vunpack.c.h.b16 %v648
    %v1384 = vunpack.c.l.b16 %v649
    %v1385 = vunpack.c.h.b16 %v649
    %v1386 = vunpack.c.l.b16 %v650
    %v1387 = vunpack.c.h.b16 %v650
    %v1388 = vunpack.c.l.b16 %v651
    %v1389 = vunpack.c.h.b16 %v651
    %v1390 = vunpack.c.l.b16 %v652
    %v1391 = vunpack.c.h.b16 %v652
    %v1392 = vunpack.c.l.b16 %v653
    %v1393 = vunpack.c.h.b16 %v653
    %v1394 = vunpack.c.l.b16 %v654
    %v1395 = vunpack.c.h.b16 %v654
    %v1396 = vunpack.c.l.b16 %v655
    %v1397 = vunpack.c.h.b16 %v655
    %v1398 = vunpack.c.l.b16 %v656
    %v1399 = vunpack.c.h.b16 %v656
    %v1400 = vunpack.c.l.b16 %v657
    %v1401 = vunpack.c.h.b16 %v657
    %v1402 = vunpack.c.l.b16 %v658
    %v1403 = vunpack.c.h.b16 %v658
    %v1404 = vunpack.c.l.b16 %v659
    %v1405 = vunpack.c.h.b16 %v659
    %v1406 = vunpack.c.l.b16 %v660
    %v1407 = vunpack.c.h.b16 %v660
    %v1408 = vunpack.c.l.b16 %v661
    %v1409 = vunpack.c.h.b16 %v661
    %v1410 = vunpack.c.l.b16 %v662
    %v1411 = vunpack.c.h.b16 %v662
    %v1412 = vunpack.c.l.b16 %v663
    %v1413 = vunpack.c.h.b16 %v663
    %v1414 = vunpack.c.l.b16 %v664
    %v1415 = vunpack.c.h.b16 %v664
    %v1416 = vunpack.c.l.b16 %v665
    %v1417 = vunpack.c.h.b16 %v665
    %v1418 = vunpack.c.l.b16 %v666
    %v1419 = vunpack.c.h.b16 %v666
    %v1420 = vunpack.c.l.b16 %v667
    %v1421 = vunpack.c.h.b16 %v667
    %v1422 = vunpack.c.l.b16 %v668
    %v1423 = vunpack.c.h.b16 %v668
    %v1424 = vunpack.c.l.b16 %v669
    %v1425 = vunpack.c.h.b16 %v669
    %v1426 = vunpack.c.l.b16 %v670
    %v1427 = vunpack.c.h.b16 %v670
    %v1428 = vunpack.c.l.b16 %v671
    %v1429 = vunpack.c.h.b16 %v671
    %v1430 = vunpack.c.l.b16 %v672
    %v1431 = vunpack.c.h.b16 %v672
    %v1432 = vunpack.c.l.b16 %v673
    %v1433 = vunpack.c.h.b16 %v673
    %v1434 = vunpack.c.l.b16 %v674
    %v1435 = vunpack.c.h.b16 %v674
    %v1436 = vunpack.c.l.b16 %v675
    %v1437 = vunpack.c.h.b16 %v675
    %v1438 = vunpack.c.l.b16 %v676
    %v1439 = vunpack.c.h.b16 %v676
    %v1440 = vunpack.c.l.b16 %v677
    %v1441 = vunpack.c.h.b16 %v677
    %v1442 = vunpack.c.l.b16 %v678
    %v1443 = vunpack.c.h.b16 %v678
    %v1444 = vunpack.c.l.b16 %v679
    %v1445 = vunpack.c.h.b16 %v679
    %v1446 = vunpack.c.l.b16 %v680
    %v1447 = vunpack.c.h.b16 %v680
    %v1448 = vunpack.c.l.b16 %v681
    %v1449 = vunpack.c.h.b16 %v681
    %v1450 = vunpack.c.l.b16 %v682
    %v1451 = vunpack.c.h.b16 %v682
    %v1452 = vunpack.c.l.b16 %v683
    %v1453 = vunpack.c.h.b16 %v683
    %v1454 = vunpack.c.l.b16 %v684
    %v1455 = vunpack.c.h.b16 %v684
    %v1456 = vunpack.c.l.b16 %v685
    %v1457 = vunpack.c.h.b16 %v685
    %v1458 = vunpack.c.l.b16 %v686
    %v1459 = vunpack.c.h.b16 %v686
    %v1460 = vunpack.c.l.b16 %v687
    %v1461 = vunpack.c.h.b16 %v687
    %v1462 = vunpack.c.l.b16 %v688
    %v1463 = vunpack.c.h.b16 %v688
    %v1464 = vunpack.c.l.b16 %v689
    %v1465 = vunpack.c.h.b16 %v689
    %v1466 = vunpack.c.l.b16 %v690
    %v1467 = vunpack.c.h.b16 %v690
    %v1468 = vunpack.c.l.b16 %v691
    %v1469 = vunpack.c.h.b16 %v691
    %v1470 = vunpack.c.l.b16 %v692
    %v1471 = vunpack.c.h.b16 %v692
    %v1472 = vunpack.c.l.b16 %v693
    %v1473 = vunpack.c.h.b16 %v693
    %v1474 = vunpack.c.l.b16 %v694
    %v1475 = vunpack.c.h.b16 %v694
    %v1476 = vunpack.c.l.b16 %v695
    %v1477 = vunpack.c.h.b16 %v695
    %v1478 = vunpack.c.l.b16 %v696
    %v1479 = vunpack.c.h.b16 %v696
    %v1480 = vunpack.c.l.b16 %v697
    %v1481 = vunpack.c.h.b16 %v697
    %v1482 = vunpack.c.l.b16 %v698
    %v1483 = vunpack.c.h.b16 %v698
    %v1484 = vunpack.c.l.b16 %v699
    %v1485 = vunpack.c.h.b16 %v699
    %v1486 = vunpack.c.l.b16 %v700
    %v1487 = vunpack.c.h.b16 %v700
    %v1488 = vunpack.c.l.b16 %v701
    %v1489 = vunpack.c.h.b16 %v701
    %v1490 = vunpack.c.l.b16 %v702
    %v1491 = vunpack.c.h.b16 %v702
    %v1492 = vunpack.c.l.b16 %v703
    %v1493 = vunpack.c.h.b16 %v703
    %v1494 = vunpack.c.l.b16 %v704
    %v1495 = vunpack.c.h.b16 %v704
    %v1496 = vunpack.c.l.b16 %v705
    %v1497 = vunpack.c.h.b16 %v705
    %v1498 = vunpack.c.l.b16 %v706
    %v1499 = vunpack.c.h.b16 %v706
    %v1500 = vunpack.c.l.b16 %v707
    %v1501 = vunpack.c.h.b16 %v707
    %v1502 = vunpack.c.l.b16 %v708
    %v1503 = vunpack.c.h.b16 %v708
    %v1504 = vunpack.c.l.b16 %v709
    %v1505 = vunpack.c.h.b16 %v709
    %v1506 = vunpack.c.l.b16 %v710
    %v1507 = vunpack.c.h.b16 %v710
    %v1508 = vunpack.c.l.b16 %v711
    %v1509 = vunpack.c.h.b16 %v711
    %v1510 = vunpack.c.l.b16 %v712
    %v1511 = vunpack.c.h.b16 %v712
    %v1512 = vunpack.c.l.b16 %v713
    %v1513 = vunpack.c.h.b16 %v713
    %v1514 = vunpack.c.l.b16 %v714
    %v1515 = vunpack.c.h.b16 %v714
    %v1516 = vunpack.c.l.b16 %v715
    %v1517 = vunpack.c.h.b16 %v715
    %v1518 = vunpack.c.l.b16 %v716
    %v1519 = vunpack.c.h.b16 %v716
    %v1520 = vunpack.c.l.b16 %v717
    %v1521 = vunpack.c.h.b16 %v717
    %v1522 = vunpack.c.l.b16 %v718
    %v1523 = vunpack.c.h.b16 %v718
    %v1524 = vunpack.c.l.b16 %v719
    %v1525 = vunpack.c.h.b16 %v719
    %v1526 = vunpack.c.l.b16 %v720
    %v1527 = vunpack.c.h.b16 %v720
    %v1528 = vunpack.c.l.b16 %v721
    %v1529 = vunpack.c.h.b16 %v721
    %v1530 = vunpack.c.l.b16 %v722
    %v1531 = vunpack.c.h.b16 %v722
    %v1532 = vunpack.c.l.b16 %v723
    %v1533 = vunpack.c.h.b16 %v723
    %v1534 = vunpack.c.l.b16 %v724
    %v1535 = vunpack.c.h.b16 %v724
    %v1536 = vunpack.c.l.b16 %v725
    %v1537 = vunpack.c.h.b16 %v725
    %v1538 = vunpack.c.l.b16 %v726
    %v1539 = vunpack.c.h.b16 %v726
    %v1540 = vunpack.c.l.b16 %v727
    %v1541 = vunpack.c.h.b16 %v727
    %v1542 = vunpack.c.l.b16 %v728
    %v1543 = vunpack.c.h.b16 %v728
    %v1544 = vunpack.c.l.b16 %v729
    %v1545 = vunpack.c.h.b16 %v729
    %v1546 = vunpack.c.l.b16 %v730
    %v1547 = vunpack.c.h.b16 %v730
    %v1548 = vunpack.c.l.b16 %v731
    %v1549 = vunpack.c.h.b16 %v731
    %v1550 = vunpack.c.l.b16 %v732
    %v1551 = vunpack.c.h.b16 %v732
    %v1552 = vunpack.c.l.b16 %v733
    %v1553 = vunpack.c.h.b16 %v733
    %v1554 = vunpack.c.l.b16 %v734
    %v1555 = vunpack.c.h.b16 %v734
    %v1556 = vunpack.c.l.b16 %v735
    %v1557 = vunpack.c.h.b16 %v735
    %v1558 = vunpack.c.l.b16 %v736
    %v1559 = vunpack.c.h.b16 %v736
    %v1560 = vunpack.c.l.b16 %v737
    %v1561 = vunpack.c.h.b16 %v737
    %v1562 = vunpack.c.l.b16 %v738
    %v1563 = vunpack.c.h.b16 %v738
    %v1564 = vunpack.c.l.b16 %v739
    %v1565 = vunpack.c.h.b16 %v739
    %v1566 = vunpack.c.l.b16 %v740
    %v1567 = vunpack.c.h.b16 %v740
    %v1568 = vunpack.c.l.b16 %v741
    %v1569 = vunpack.c.h.b16 %v741
    %v1570 = vunpack.c.l.b16 %v742
    %v1571 = vunpack.c.h.b16 %v742
    %v1572 = vunpack.c.l.b16 %v743
    %v1573 = vunpack.c.h.b16 %v743
    %v1574 = vunpack.c.l.b16 %v744
    %v1575 = vunpack.c.h.b16 %v744
    %v1576 = vunpack.c.l.b16 %v745
    %v1577 = vunpack.c.h.b16 %v745
    %v1578 = vunpack.c.l.b16 %v746
    %v1579 = vunpack.c.h.b16 %v746
    %v1580 = vunpack.c.l.b16 %v747
    %v1581 = vunpack.c.h.b16 %v747
    %v1582 = vunpack.c.l.b16 %v748
    %v1583 = vunpack.c.h.b16 %v748
    %v1584 = vunpack.c.l.b16 %v749
    %v1585 = vunpack.c.h.b16 %v749
    %v1586 = vunpack.c.l.b16 %v750
    %v1587 = vunpack.c.h.b16 %v750
    %v1588 = vunpack.c.l.b16 %v751
    %v1589 = vunpack.c.h.b16 %v751
    %v1590 = vunpack.c.l.b16 %v752
    %v1591 = vunpack.c.h.b16 %v752
    %v1592 = vunpack.c.l.b16 %v753
    %v1593 = vunpack.c.h.b16 %v753
    %v1594 = vunpack.c.l.b16 %v754
    %v1595 = vunpack.c.h.b16 %v754
    %v1596 = vunpack.c.l.b16 %v755
    %v1597 = vunpack.c.h.b16 %v755
    %v1598 = vunpack.c.l.b16 %v756
    %v1599 = vunpack.c.h.b16 %v756
    %v1600 = vunpack.c.l.b16 %v757
    %v1601 = vunpack.c.h.b16 %v757
    %v1602 = vunpack.c.l.b16 %v758
    %v1603 = vunpack.c.h.b16 %v758
    %v1604 = vunpack.c.l.b16 %v759
    %v1605 = vunpack.c.h.b16 %v759
    %v1606 = vunpack.c.l.b16 %v760
    %v1607 = vunpack.c.h.b16 %v760
    %v1608 = vunpack.c.l.b16 %v761
    %v1609 = vunpack.c.h.b16 %v761
    %v1610 = vunpack.c.l.b16 %v762
    %v1611 = vunpack.c.h.b16 %v762
    %v1612 = vunpack.c.l.b16 %v763
    %v1613 = vunpack.c.h.b16 %v763
    %v1614 = vunpack.c.l.b16 %v764
    %v1615 = vunpack.c.h.b16 %v764
    %v1616 = vunpack.c.l.b16 %v765
    %v1617 = vunpack.c.h.b16 %v765
    %v1618 = vunpack.c.l.b16 %v766
    %v1619 = vunpack.c.h.b16 %v766
    %v1620 = vunpack.c.l.b16 %v767
    %v1621 = vunpack.c.h.b16 %v767
    %v1622 = vunpack.c.l.b16 %v768
    %v1623 = vunpack.c.h.b16 %v768
    %v1624 = vunpack.c.l.b16 %v769
    %v1625 = vunpack.c.h.b16 %v769
    %v1626 = vunpack.c.l.b16 %v770
    %v1627 = vunpack.c.h.b16 %v770
    %v1628 = vunpack.c.l.b16 %v771
    %v1629 = vunpack.c.h.b16 %v771
    %v1630 = vunpack.c.l.b16 %v772
    %v1631 = vunpack.c.h.b16 %v772
    %v1632 = vunpack.c.l.b16 %v773
    %v1633 = vunpack.c.h.b16 %v773
    %v1634 = vunpack.c.l.b16 %v774
    %v1635 = vunpack.c.h.b16 %v774
    %v1636 = vunpack.c.l.b16 %v775
    %v1637 = vunpack.c.h.b16 %v775
    %v1638 = vunpack.c.l.b16 %v776
    %v1639 = vunpack.c.h.b16 %v776
    %v1640 = vunpack.c.l.b16 %v777
    %v1641 = vunpack.c.h.b16 %v777
    %v1642 = vunpack.c.l.b16 %v778
    %v1643 = vunpack.c.h.b16 %v778
    %v1644 = vunpack.c.l.b16 %v779
    %v1645 = vunpack.c.h.b16 %v779
    %v1646 = vunpack.c.l.b16 %v780
    %v1647 = vunpack.c.h.b16 %v780
    %v1648 = vunpack.c.l.b16 %v781
    %v1649 = vunpack.c.h.b16 %v781
    %v1650 = vunpack.c.l.b16 %v782
    %v1651 = vunpack.c.h.b16 %v782
    %v1652 = vunpack.c.l.b16 %v783
    %v1653 = vunpack.c.h.b16 %v783
    %v1654 = vunpack.c.l.b16 %v784
    %v1655 = vunpack.c.h.b16 %v784
    %v1656 = vunpack.c.l.b16 %v785
    %v1657 = vunpack.c.h.b16 %v785
    %v1658 = vunpack.c.l.b16 %v786
    %v1659 = vunpack.c.h.b16 %v786
    %v1660 = vunpack.c.l.b16 %v787
    %v1661 = vunpack.c.h.b16 %v787
    %v1662 = vunpack.c.l.b16 %v788
    %v1663 = vunpack.c.h.b16 %v788
    %v1664 = vunpack.c.l.b16 %v789
    %v1665 = vunpack.c.h.b16 %v789
    %v1666 = vunpack.c.l.b16 %v790
    %v1667 = vunpack.c.h.b16 %v790
    %v1668 = vunpack.c.l.b16 %v791
    %v1669 = vunpack.c.h.b16 %v791
    %v1670 = vunpack.c.l.b16 %v792
    %v1671 = vunpack.c.h.b16 %v792
    %v1672 = vunpack.c.l.b16 %v793
    %v1673 = vunpack.c.h.b16 %v793
    %v1674 = vunpack.c.l.b16 %v794
    %v1675 = vunpack.c.h.b16 %v794
    %v1676 = vunpack.c.l.b16 %v795
    %v1677 = vunpack.c.h.b16 %v795
    %v1678 = vunpack.c.l.b16 %v796
    %v1679 = vunpack.c.h.b16 %v796
    %v1680 = vunpack.c.l.b16 %v797
    %v1681 = vunpack.c.h.b16 %v797
    %v1682 = vunpack.c.l.b16 %v798
    %v1683 = vunpack.c.h.b16 %v798
    %v1684 = vunpack.c.l.b16 %v799
    %v1685 = vunpack.c.h.b16 %v799
    %v1686 = vunpack.c.l.b16 %v800
    %v1687 = vunpack.c.h.b16 %v800
    %v1688 = vunpack.c.l.b16 %v801
    %v1689 = vunpack.c.h.b16 %v801
    %v1690 = vunpack.c.l.b16 %v802
    %v1691 = vunpack.c.h.b16 %v802
    %v1692 = vunpack.c.l.b16 %v803
    %v1693 = vunpack.c.h.b16 %v803
    %v1694 = vunpack.c.l.b16 %v804
    %v1695 = vunpack.c.h.b16 %v804
    %v1696 = vunpack.c.l.b16 %v805
    %v1697 = vunpack.c.h.b16 %v805
    %v1698 = vunpack.c.l.b16 %v806
    %v1699 = vunpack.c.h.b16 %v806
    %v1700 = vunpack.c.l.b16 %v807
    %v1701 = vunpack.c.h.b16 %v807
    %v1702 = vunpack.c.l.b16 %v808
    %v1703 = vunpack.c.h.b16 %v808
    %v1704 = vunpack.c.l.b16 %v809
    %v1705 = vunpack.c.h.b16 %v809
    %v1706 = vpack.c.b16 %v1136, %v1130
    %v1707 = vpack.c.b16 %v1137, %v1131
    %v1708 = vpack.c.b16 %v1138, %v1132
    %v1709 = vpack.c.b16 %v1139, %v1133
    %v1710 = vpack.c.b16 %v1140, %v1134
    %v1711 = vpack.c.b16 %v1141, %v1135
    %v1712 = vpack.c.b16 %v1148, %v1142
    %v1713 = vpack.c.b16 %v1149, %v1143
    %v1714 = vpack.c.b16 %v1150, %v1144
    %v1715 = vpack.c.b16 %v1151, %v1145
    %v1716 = vpack.c.b16 %v1152, %v1146
    %v1717 = vpack.c.b16 %v1153, %v1147
    %v1718 = vpack.c.b16 %v1160, %v1154
    %v1719 = vpack.c.b16 %v1161, %v1155
    %v1720 = vpack.c.b16 %v1162, %v1156
    %v1721 = vpack.c.b16 %v1163, %v1157
    %v1722 = vpack.c.b16 %v1164, %v1158
    %v1723 = vpack.c.b16 %v1165, %v1159
    %v1724 = vpack.c.b16 %v1172, %v1166
    %v1725 = vpack.c.b16 %v1173, %v1167
    %v1726 = vpack.c.b16 %v1174, %v1168
    %v1727 = vpack.c.b16 %v1175, %v1169
    %v1728 = vpack.c.b16 %v1176, %v1170
    %v1729 = vpack.c.b16 %v1177, %v1171
    %v1730 = vpack.c.b16 %v1184, %v1178
    %v1731 = vpack.c.b16 %v1185, %v1179
    %v1732 = vpack.c.b16 %v1186, %v1180
    %v1733 = vpack.c.b16 %v1187, %v1181
    %v1734 = vpack.c.b16 %v1188, %v1182
    %v1735 = vpack.c.b16 %v1189, %v1183
    %v1736 = vpack.c.b16 %v1196, %v1190
    %v1737 = vpack.c.b16 %v1197, %v1191
    %v1738 = vpack.c.b16 %v1198, %v1192
    %v1739 = vpack.c.b16 %v1199, %v1193
    %v1740 = vpack.c.b16 %v1200, %v1194
    %v1741 = vpack.c.b16 %v1201, %v1195
    %v1742 = vpack.c.b16 %v1208, %v1202
    %v1743 = vpack.c.b16 %v1209, %v1203
    %v1744 = vpack.c.b16 %v1210, %v1204
    %v1745 = vpack.c.b16 %v1211, %v1205
    %v1746 = vpack.c.b16 %v1212, %v1206
    %v1747 = vpack.c.b16 %v1213, %v1207
    %v1748 = vpack.c.b16 %v1220, %v1214
    %v1749 = vpack.c.b16 %v1221, %v1215
    %v1750 = vpack.c.b16 %v1222, %v1216
    %v1751 = vpack.c.b16 %v1223, %v1217
    %v1752 = vpack.c.b16 %v1224, %v1218
    %v1753 = vpack.c.b16 %v1225, %v1219
    %v1754 = vpack.c.b16 %v1232, %v1226
    %v1755 = vpack.c.b16 %v1233, %v1227
    %v1756 = vpack.c.b16 %v1234, %v1228
    %v1757 = vpack.c.b16 %v1235, %v1229
    %v1758 = vpack.c.b16 %v1236, %v1230
    %v1759 = vpack.c.b16 %v1237, %v1231
    %v1760 = vpack.c.b16 %v1244, %v1238
    %v1761 = vpack.c.b16 %v1245, %v1239
    %v1762 = vpack.c.b16 %v1246, %v1240
    %v1763 = vpack.c.b16 %v1247, %v1241
    %v1764 = vpack.c.b16 %v1248, %v1242
    %v1765 = vpack.c.b16 %v1249, %v1243
    %v1766 = vpack.c.b16 %v1256, %v1250
    %v1767 = vpack.c.b16 %v1257, %v1251
    %v1768 = vpack.c.b16 %v1258, %v1252
    %v1769 = vpack.c.b16 %v1259, %v1253
    %v1770 = vpack.c.b16 %v1260, %v1254
    %v1771 = vpack.c.b16 %v1261, %v1255
    %v1772 = vpack.c.b16 %v1268, %v1262
    %v1773 = vpack.c.b16 %v1269, %v1263
    %v1774 = vpack.c.b16 %v1270, %v1264
    %v1775 = vpack.c.b16 %v1271, %v1265
    %v1776 = vpack.c.b16 %v1272, %v1266
    %v1777 = vpack.c.b16 %v1273, %v1267
    %v1778 = vpack.c.b16 %v1280, %v1274
    %v1779 = vpack.c.b16 %v1281, %v1275
    %v1780 = vpack.c.b16 %v1282, %v1276
    %v1781 = vpack.c.b16 %v1283, %v1277
    %v1782 = vpack.c.b16 %v1284, %v1278
    %v1783 = vpack.c.b16 %v1285, %v1279
    %v1784 = vpack.c.b16 %v1292, %v1286
    %v1785 = vpack.c.b16 %v1293, %v1287
    %v1786 = vpack.c.b16 %v1294, %v1288
    %v1787 = vpack.c.b16 %v1295, %v1289
    %v1788 = vpack.c.b16 %v1296, %v1290
    %v1789 = vpack.c.b16 %v1297, %v1291
    %v1790 = vpack.c.b16 %v1304, %v1298
    %v1791 = vpack.c.b16 %v1305, %v1299
    %v1792 = vpack.c.b16 %v1306, %v1300
    %v1793 = vpack.c.b16 %v1307, %v1301
    %v1794 = vpack.c.b16 %v1308, %v1302
    %v1795 = vpack.c.b16 %v1309, %v1303
    %v1796 = vpack.c.b16 %v1316, %v1310
    %v1797 = vpack.c.b16 %v1317, %v1311
    %v1798 = vpack.c.b16 %v1318, %v1312
    %v1799 = vpack.c.b16 %v1319, %v1313
    %v1800 = vpack.c.b16 %v1320, %v1314
    %v1801 = vpack.c.b16 %v1321, %v1315
    %v1802 = vpack.c.b16 %v1328, %v1322
    %v1803 = vpack.c.b16 %v1329, %v1323
    %v1804 = vpack.c.b16 %v1330, %v1324
    %v1805 = vpack.c.b16 %v1331, %v1325
    %v1806 = vpack.c.b16 %v1332, %v1326
    %v1807 = vpack.c.b16 %v1333, %v1327
    %v1808 = vpack.c.b16 %v1340, %v1334
    %v1809 = vpack.c.b16 %v1341, %v1335
    %v1810 = vpack.c.b16 %v1342, %v1336
    %v1811 = vpack.c.b16 %v1343, %v1337
    %v1812 = vpack.c.b16 %v1344, %v1338
    %v1813 = vpack.c.b16 %v1345, %v1339
    %v1814 = vpack.c.b16 %v1352, %v1346
    %v1815 = vpack.c.b16 %v1353, %v1347
    %v1816 = vpack.c.b16 %v1354, %v1348
    %v1817 = vpack.c.b16 %v1355, %v1349
    %v1818 = vpack.c.b16 %v1356, %v1350
    %v1819 = vpack.c.b16 %v1357, %v1351
    %v1820 = vpack.c.b16 %v1364, %v1358
    %v1821 = vpack.c.b16 %v1365, %v1359
    %v1822 = vpack.c.b16 %v1366, %v1360
    %v1823 = vpack.c.b16 %v1367, %v1361
    %v1824 = vpack.c.b16 %v1368, %v1362
    %v1825 = vpack.c.b16 %v1369, %v1363
    %v1826 = vpack.c.b16 %v1376, %v1370
    %v1827 = vpack.c.b16 %v1377, %v1371
    %v1828 = vpack.c.b16 %v1378, %v1372
    %v1829 = vpack.c.b16 %v1379, %v1373
    %v1830 = vpack.c.b16 %v1380, %v1374
    %v1831 = vpack.c.b16 %v1381, %v1375
    %v1832 = vpack.c.b16 %v1388, %v1382
    %v1833 = vpack.c.b16 %v1389, %v1383
    %v1834 = vpack.c.b16 %v1390, %v1384
    %v1835 = vpack.c.b16 %v1391, %v1385
    %v1836 = vpack.c.b16 %v1392, %v1386
    %v1837 = vpack.c.b16 %v1393, %v1387
    %v1838 = vpack.c.b16 %v1400, %v1394
    %v1839 = vpack.c.b16 %v1401, %v1395
    %v1840 = vpack.c.b16 %v1402, %v1396
    %v1841 = vpack.c.b16 %v1403, %v1397
    %v1842 = vpack.c.b16 %v1404, %v1398
    %v1843 = vpack.c.b16 %v1405, %v1399
    %v1844 = vpack.c.b16 %v1412, %v1406
    %v1845 = vpack.c.b16 %v1413, %v1407
    %v1846 = vpack.c.b16 %v1414, %v1408
    %v1847 = vpack.c.b16 %v1415, %v1409
    %v1848 = vpack.c.b16 %v1416, %v1410
    %v1849 = vpack.c.b16 %v1417, %v1411
    %v1850 = vpack.c.b16 %v1424, %v1418
    %v1851 = vpack.c.b16 %v1425, %v1419
    %v1852 = vpack.c.b16 %v1426, %v1420
    %v1853 = vpack.c.b16 %v1427, %v1421
    %v1854 = vpack.c.b16 %v1428, %v1422
    %v1855 = vpack.c.b16 %v1429, %v1423
    %v1856 = vpack.c.b16 %v1436, %v1430
    %v1857 = vpack.c.b16 %v1437, %v1431
    %v1858 = vpack.c.b16 %v1438, %v1432
    %v1859 = vpack.c.b16 %v1439, %v1433
    %v1860 = vpack.c.b16 %v1440, %v1434
    %v1861 = vpack.c.b16 %v1441, %v1435
    %v1862 = vpack.c.b16 %v1448, %v1442
    %v1863 = vpack.c.b16 %v1449, %v1443
    %v1864 = vpack.c.b16 %v1450, %v1444
    %v1865 = vpack.c.b16 %v1451, %v1445
    %v1866 = vpack.c.b16 %v1452, %v1446
    %v1867 = vpack.c.b16 %v1453, %v1447
    %v1868 = vpack.c.b16 %v1460, %v1454
    %v1869 = vpack.c.b16 %v1461, %v1455
    %v1870 = vpack.c.b16 %v1462, %v1456
    %v1871 = vpack.c.b16 %v1463, %v1457
    %v1872 = vpack.c.b16 %v1464, %v1458
    %v1873 = vpack.c.b16 %v1465, %v1459
    %v1874 = vpack.c.b16 %v1472, %v1466
    %v1875 = vpack.c.b16 %v1473, %v1467
    %v1876 = vpack.c.b16 %v1474, %v1468
    %v1877 = vpack.c.b16 %v1475, %v1469
    %v1878 = vpack.c.b16 %v1476, %v1470
    %v1879 = vpack.c.b16 %v1477, %v1471
    %v1880 = vpack.c.b16 %v1484, %v1478
    %v1881 = vpack.c.b16 %v1485, %v1479
    %v1882 = vpack.c.b16 %v1486, %v1480
    %v1883 = vpack.c.b16 %v1487, %v1481
    %v1884 = vpack.c.b16 %v1488, %v1482
    %v1885 = vpack.c.b16 %v1489, %v1483
    %v1886 = vpack.c.b16 %v1496, %v1490
    %v1887 = vpack.c.b16 %v1497, %v1491
    %v1888 = vpack.c.b16 %v1498, %v1492
    %v1889 = vpack.c.b16 %v1499, %v1493
    %v1890 = vpack.c.b16 %v1500, %v1494
    %v1891 = vpack.c.b16 %v1501, %v1495
    %v1892 = vpack.c.b16 %v1508, %v1502
    %v1893 = vpack.c.b16 %v1509, %v1503
    %v1894 = vpack.c.b16 %v1510, %v1504
    %v1895 = vpack.c.b16 %v1511, %v1505
    %v1896 = vpack.c.b16 %v1512, %v1506
    %v1897 = vpack.c.b16 %v1513, %v1507
    %v1898 = vpack.c.b16 %v1520, %v1514
    %v1899 = vpack.c.b16 %v1521, %v1515
    %v1900 = vpack.c.b16 %v1522, %v1516
    %v1901 = vpack.c.b16 %v1523, %v1517
    %v1902 = vpack.c.b16 %v1524, %v1518
    %v1903 = vpack.c.b16 %v1525, %v1519
    %v1904 = vpack.c.b16 %v1532, %v1526
    %v1905 = vpack.c.b16 %v1533, %v1527
    %v1906 = vpack.c.b16 %v1534, %v1528
    %v1907 = vpack.c.b16 %v1535, %v1529
    %v1908 = vpack.c.b16 %v1536, %v1530
    %v1909 = vpack.c.b16 %v1537, %v1531
    %v1910 = vpack.c.b16 %v1544, %v1538
    %v1911 = vpack.c.b16 %v1545, %v1539
    %v1912 = vpack.c.b16 %v1546, %v1540
    %v1913 = vpack.c.b16 %v1547, %v1541
    %v1914 = vpack.c.b16 %v1548, %v1542
    %v1915 = vpack.c.b16 %v1549, %v1543
    %v1916 = vpack.c.b16 %v1556, %v1550
    %v1917 = vpack.c.b16 %v1557, %v1551
    %v1918 = vpack.c.b16 %v1558, %v1552
    %v1919 = vpack.c.b16 %v1559, %v1553
    %v1920 = vpack.c.b16 %v1560, %v1554
    %v1921 = vpack.c.b16 %v1561, %v1555
    %v1922 = vpack.c.b16 %v1568, %v1562
    %v1923 = vpack.c.b16 %v1569, %v1563
    %v1924 = vpack.c.b16 %v1570, %v1564
    %v1925 = vpack.c.b16 %v1571, %v1565
    %v1926 = vpack.c.b16 %v1572, %v1566
    %v1927 = vpack.c.b16 %v1573, %v1567
    %v1928 = vpack.c.b16 %v1580, %v1574
    %v1929 = vpack.c.b16 %v1581, %v1575
    %v1930 = vpack.c.b16 %v1582, %v1576
    %v1931 = vpack.c.b16 %v1583, %v1577
    %v1932 = vpack.c.b16 %v1584, %v1578
    %v1933 = vpack.c.b16 %v1585, %v1579
    %v1934 = vpack.c.b16 %v1592, %v1586
    %v1935 = vpack.c.b16 %v1593, %v1587
    %v1936 = vpack.c.b16 %v1594, %v1588
    %v1937 = vpack.c.b16 %v1595, %v1589
    %v1938 = vpack.c.b16 %v1596, %v1590
    %v1939 = vpack.c.b16 %v1597, %v1591
    %v1940 = vpack.c.b16 %v1604, %v1598
    %v1941 = vpack.c.b16 %v1605, %v1599
    %v1942 = vpack.c.b16 %v1606, %v1600
    %v1943 = vpack.c.b16 %v1607, %v1601
    %v1944 = vpack.c.b16 %v1608, %v1602
    %v1945 = vpack.c.b16 %v1609, %v1603
    %v1946 = vpack.c.b16 %v1616, %v1610
    %v1947 = vpack.c.b16 %v1617, %v1611
    %v1948 = vpack.c.b16 %v1618, %v1612
    %v1949 = vpack.c.b16 %v1619, %v1613
    %v1950 = vpack.c.b16 %v1620, %v1614
    %v1951 = vpack.c.b16 %v1621, %v1615
    %v1952 = vpack.c.b16 %v1628, %v1622
    %v1953 = vpack.c.b16 %v1629, %v1623
    %v1954 = vpack.c.b16 %v1630, %v1624
    %v1955 = vpack.c.b16 %v1631, %v1625
    %v1956 = vpack.c.b16 %v1632, %v1626
    %v1957 = vpack.c.b16 %v1633, %v1627
    %v1958 = vpack.c.b16 %v1640, %v1634
    %v1959 = vpack.c.b16 %v1641, %v1635
    %v1960 = vpack.c.b16 %v1642, %v1636
    %v1961 = vpack.c.b16 %v1643, %v1637
    %v1962 = vpack.c.b16 %v1644, %v1638
    %v1963 = vpack.c.b16 %v1645, %v1639
    %v1964 = vpack.c.b16 %v1652, %v1646
    %v1965 = vpack.c.b16 %v1653, %v1647
    %v1966 = vpack.c.b16 %v1654, %v1648
    %v1967 = vpack.c.b16 %v1655, %v1649
    %v1968 = vpack.c.b16 %v1656, %v1650
    %v1969 = vpack.c.b16 %v1657, %v1651
    %v1970 = vpack.c.b16 %v1664, %v1658
    %v1971 = vpack.c.b16 %v1665, %v1659
    %v1972 = vpack.c.b16 %v1666, %v1660
    %v1973 = vpack.c.b16 %v1667, %v1661
    %v1974 = vpack.c.b16 %v1668, %v1662
    %v1975 = vpack.c.b16 %v1669, %v1663
    %v1976 = vpack.c.b16 %v1676, %v1670
    %v1977 = vpack.c.b16 %v1677, %v1671
    %v1978 = vpack.c.b16 %v1678, %v1672
    %v1979 = vpack.c.b16 %v1679, %v1673
    %v1980 = vpack.c.b16 %v1680, %v1674
    %v1981 = vpack.c.b16 %v1681, %v1675
    %v1982 = vpack.c.b16 %v1688, %v1682
    %v1983 = vpack.c.b16 %v1689, %v1683
    %v1984 = vpack.c.b16 %v1690, %v1684
    %v1985 = vpack.c.b16 %v1691, %v1685
    %v1986 = vpack.c.b16 %v1692, %v1686
    %v1987 = vpack.c.b16 %v1693, %v1687
    %v1988 = vpack.c.b16 %v1700, %v1694
    %v1989 = vpack.c.b16 %v1701, %v1695
    %v1990 = vpack.c.b16 %v1702, %v1696
    %v1991 = vpack.c.b16 %v1703, %v1697
    %v1992 = vpack.c.b16 %v1704, %v1698
    %v1993 = vpack.c.b16 %v1705, %v1699
    %2282 = vmatprep.subr.bf16.mxu0 %v1749
    %2283 = vmatpush1.bf16.msra.mxu0 %v1748
    %2284 = vmatprep.subr.bf16.mxu0 %v1743
    %2285 = vmatpush1.bf16.msra.mxu0 %v1742
    %2286 = vmatprep.subr.bf16.mxu0 %v1737
    %2287 = vmatpush1.bf16.msra.mxu0 %v1736
    %2288 = vmatprep.subr.bf16.mxu0 %v1731
    %2289 = vmatpush1.bf16.msra.mxu0 %v1730
    %2290 = vmatprep.subr.bf16.mxu0 %v1725
    %2291 = vmatpush1.bf16.msra.mxu0 %v1724
    %2292 = vmatprep.subr.bf16.mxu0 %v1719
    %2293 = vmatpush1.bf16.msra.mxu0 %v1718
    %2294 = vmatprep.subr.bf16.mxu0 %v1713
    %2295 = vmatpush1.bf16.msra.mxu0 %v1712
    %2296 = vmatprep.subr.bf16.mxu0 %v1707
    %2297 = vmatpush1.bf16.msra.mxu0 %v1706
    %2298 = vmatprep.subr.bf16.mxu0 %v1797
    %2299 = vmatpush2.bf16.msra.mxu0 %v1796
    %2300 = vmatprep.subr.bf16.mxu0 %v1791
    %2301 = vmatpush2.bf16.msra.mxu0 %v1790
    %2302 = vmatprep.subr.bf16.mxu0 %v1785
    %2303 = vmatpush2.bf16.msra.mxu0 %v1784
    %2304 = vmatprep.subr.bf16.mxu0 %v1779
    %2305 = vmatpush2.bf16.msra.mxu0 %v1778
    %2306 = vmatprep.subr.bf16.mxu0 %v1773
    %2307 = vmatpush2.bf16.msra.mxu0 %v1772
    %2308 = vmatprep.subr.bf16.mxu0 %v1767
    %2309 = vmatpush2.bf16.msra.mxu0 %v1766
    %2310 = vmatprep.subr.bf16.mxu0 %v1761
    %2311 = vmatpush2.bf16.msra.mxu0 %v1760
    %2312 = vmatprep.subr.bf16.mxu0 %v1755
    %2313 = vmatpush2.bf16.msra.mxu0 %v1754
    %2314 = vmatprep.mubr.bf16.mxu0 %v517
    %2315 = vmatmul.mubr.bf16.gmra.mxu0 %v516
    %v2316 = vpop.f32.mrf.mxu0
    %v2317 = vadd.f32 %v815, %v2316
    %v2318 = vpop.f32.mrf.mxu0
    %v2319 = vadd.f32 %v819, %v2318
    %v2320 = vpop.f32.mrf.mxu0
    %v2321 = vadd.f32 %v815, %v2320
    %v2322 = vpop.f32.mrf.mxu0
    %v2323 = vadd.f32 %v819, %v2322
    %2324 = vdwg.mxu0
    %2325 = vmatprep.subr.bf16.mxu0 %v1845
    %2326 = vmatpush1.bf16.msra.mxu0 %v1844
    %2327 = vmatprep.subr.bf16.mxu0 %v1839
    %2328 = vmatpush1.bf16.msra.mxu0 %v1838
    %2329 = vmatprep.subr.bf16.mxu0 %v1833
    %2330 = vmatpush1.bf16.msra.mxu0 %v1832
    %2331 = vmatprep.subr.bf16.mxu0 %v1827
    %2332 = vmatpush1.bf16.msra.mxu0 %v1826
    %2333 = vmatprep.subr.bf16.mxu0 %v1821
    %2334 = vmatpush1.bf16.msra.mxu0 %v1820
    %2335 = vmatprep.subr.bf16.mxu0 %v1815
    %2336 = vmatpush1.bf16.msra.mxu0 %v1814
    %2337 = vmatprep.subr.bf16.mxu0 %v1809
    %2338 = vmatpush1.bf16.msra.mxu0 %v1808
    %2339 = vmatprep.subr.bf16.mxu0 %v1803
    %2340 = vmatpush1.bf16.msra.mxu0 %v1802
    %2341 = vmatprep.subr.bf16.mxu0 %v1893
    %2342 = vmatpush2.bf16.msra.mxu0 %v1892
    %2343 = vmatprep.subr.bf16.mxu0 %v1887
    %2344 = vmatpush2.bf16.msra.mxu0 %v1886
    %2345 = vmatprep.subr.bf16.mxu0 %v1881
    %2346 = vmatpush2.bf16.msra.mxu0 %v1880
    %2347 = vmatprep.subr.bf16.mxu0 %v1875
    %2348 = vmatpush2.bf16.msra.mxu0 %v1874
    %2349 = vmatprep.subr.bf16.mxu0 %v1869
    %2350 = vmatpush2.bf16.msra.mxu0 %v1868
    %2351 = vmatprep.subr.bf16.mxu0 %v1863
    %2352 = vmatpush2.bf16.msra.mxu0 %v1862
    %2353 = vmatprep.subr.bf16.mxu0 %v1857
    %2354 = vmatpush2.bf16.msra.mxu0 %v1856
    %2355 = vmatprep.subr.bf16.mxu0 %v1851
    %2356 = vmatpush2.bf16.msra.mxu0 %v1850
    %2357 = vmatprep.mubr.bf16.mxu0 %v519
    %2358 = vmatmul.mubr.bf16.gmra.mxu0 %v518
    %v2359 = vpop.f32.mrf.mxu0
    %v2360 = vadd.f32 %v2317, %v2359
    %v2361 = vpop.f32.mrf.mxu0
    %v2362 = vadd.f32 %v2319, %v2361
    %v2363 = vpop.f32.mrf.mxu0
    %v2364 = vadd.f32 %v2321, %v2363
    %v2365 = vpop.f32.mrf.mxu0
    %v2366 = vadd.f32 %v2323, %v2365
    %2367 = vdwg.mxu0
    %2368 = vmatprep.subr.bf16.mxu0 %v1941
    %2369 = vmatpush1.bf16.msra.mxu0 %v1940
    %2370 = vmatprep.subr.bf16.mxu0 %v1935
    %2371 = vmatpush1.bf16.msra.mxu0 %v1934
    %2372 = vmatprep.subr.bf16.mxu0 %v1929
    %2373 = vmatpush1.bf16.msra.mxu0 %v1928
    %2374 = vmatprep.subr.bf16.mxu0 %v1923
    %2375 = vmatpush1.bf16.msra.mxu0 %v1922
    %2376 = vmatprep.subr.bf16.mxu0 %v1917
    %2377 = vmatpush1.bf16.msra.mxu0 %v1916
    %2378 = vmatprep.subr.bf16.mxu0 %v1911
    %2379 = vmatpush1.bf16.msra.mxu0 %v1910
    %2380 = vmatprep.subr.bf16.mxu0 %v1905
    %2381 = vmatpush1.bf16.msra.mxu0 %v1904
    %2382 = vmatprep.subr.bf16.mxu0 %v1899
    %2383 = vmatpush1.bf16.msra.mxu0 %v1898
    %2384 = vmatprep.subr.bf16.mxu0 %v1989
    %2385 = vmatpush2.bf16.msra.mxu0 %v1988
    %2386 = vmatprep.subr.bf16.mxu0 %v1983
    %2387 = vmatpush2.bf16.msra.mxu0 %v1982
    %2388 = vmatprep.subr.bf16.mxu0 %v1977
    %2389 = vmatpush2.bf16.msra.mxu0 %v1976
    %2390 = vmatprep.subr.bf16.mxu0 %v1971
    %2391 = vmatpush2.bf16.msra.mxu0 %v1970
    %2392 = vmatprep.subr.bf16.mxu0 %v1965
    %2393 = vmatpush2.bf16.msra.mxu0 %v1964
    %2394 = vmatprep.subr.bf16.mxu0 %v1959
    %2395 = vmatpush2.bf16.msra.mxu0 %v1958
    %2396 = vmatprep.subr.bf16.mxu0 %v1953
    %2397 = vmatpush2.bf16.msra.mxu0 %v1952
    %2398 = vmatprep.subr.bf16.mxu0 %v1947
    %2399 = vmatpush2.bf16.msra.mxu0 %v1946
    %2400 = vmatprep.mubr.bf16.mxu0 %v521
    %2401 = vmatmul.mubr.bf16.gmra.mxu0 %v520
    %v2402 = vpop.f32.mrf.mxu0
    %v2403 = vadd.f32 %v2360, %v2402
    %v2404 = vpop.f32.mrf.mxu0
    %v2405 = vadd.f32 %v2362, %v2404
    %v2406 = vpop.f32.mrf.mxu0
    %v2407 = vadd.f32 %v2364, %v2406
    %v2408 = vpop.f32.mrf.mxu0
    %v2409 = vadd.f32 %v2366, %v2408
    %2410 = vdwg.mxu0
    %2411 = vmatprep.subr.bf16.mxu0 %v1751
    %2412 = vmatpush1.bf16.msra.mxu0 %v1750
    %2413 = vmatprep.subr.bf16.mxu0 %v1745
    %2414 = vmatpush1.bf16.msra.mxu0 %v1744
    %2415 = vmatprep.subr.bf16.mxu0 %v1739
    %2416 = vmatpush1.bf16.msra.mxu0 %v1738
    %2417 = vmatprep.subr.bf16.mxu0 %v1733
    %2418 = vmatpush1.bf16.msra.mxu0 %v1732
    %2419 = vmatprep.subr.bf16.mxu0 %v1727
    %2420 = vmatpush1.bf16.msra.mxu0 %v1726
    %2421 = vmatprep.subr.bf16.mxu0 %v1721
    %2422 = vmatpush1.bf16.msra.mxu0 %v1720
    %2423 = vmatprep.subr.bf16.mxu0 %v1715
    %2424 = vmatpush1.bf16.msra.mxu0 %v1714
    %2425 = vmatprep.subr.bf16.mxu0 %v1709
    %2426 = vmatpush1.bf16.msra.mxu0 %v1708
    %2427 = vmatprep.subr.bf16.mxu0 %v1799
    %2428 = vmatpush2.bf16.msra.mxu0 %v1798
    %2429 = vmatprep.subr.bf16.mxu0 %v1793
    %2430 = vmatpush2.bf16.msra.mxu0 %v1792
    %2431 = vmatprep.subr.bf16.mxu0 %v1787
    %2432 = vmatpush2.bf16.msra.mxu0 %v1786
    %2433 = vmatprep.subr.bf16.mxu0 %v1781
    %2434 = vmatpush2.bf16.msra.mxu0 %v1780
    %2435 = vmatprep.subr.bf16.mxu0 %v1775
    %2436 = vmatpush2.bf16.msra.mxu0 %v1774
    %2437 = vmatprep.subr.bf16.mxu0 %v1769
    %2438 = vmatpush2.bf16.msra.mxu0 %v1768
    %2439 = vmatprep.subr.bf16.mxu0 %v1763
    %2440 = vmatpush2.bf16.msra.mxu0 %v1762
    %2441 = vmatprep.subr.bf16.mxu0 %v1757
    %2442 = vmatpush2.bf16.msra.mxu0 %v1756
    %2443 = vmatprep.mubr.bf16.mxu0 %v517
    %2444 = vmatmul.mubr.bf16.gmra.mxu0 %v516
    %v2445 = vpop.f32.mrf.mxu0
    %v2446 = vadd.f32 %v823, %v2445
    %v2447 = vpop.f32.mrf.mxu0
    %v2448 = vadd.f32 %v827, %v2447
    %v2449 = vpop.f32.mrf.mxu0
    %v2450 = vadd.f32 %v823, %v2449
    %v2451 = vpop.f32.mrf.mxu0
    %v2452 = vadd.f32 %v827, %v2451
    %2453 = vdwg.mxu0
    %2454 = vmatprep.subr.bf16.mxu0 %v1847
    %2455 = vmatpush1.bf16.msra.mxu0 %v1846
    %2456 = vmatprep.subr.bf16.mxu0 %v1841
    %2457 = vmatpush1.bf16.msra.mxu0 %v1840
    %2458 = vmatprep.subr.bf16.mxu0 %v1835
    %2459 = vmatpush1.bf16.msra.mxu0 %v1834
    %2460 = vmatprep.subr.bf16.mxu0 %v1829
    %2461 = vmatpush1.bf16.msra.mxu0 %v1828
    %2462 = vmatprep.subr.bf16.mxu0 %v1823
    %2463 = vmatpush1.bf16.msra.mxu0 %v1822
    %2464 = vmatprep.subr.bf16.mxu0 %v1817
    %2465 = vmatpush1.bf16.msra.mxu0 %v1816
    %2466 = vmatprep.subr.bf16.mxu0 %v1811
    %2467 = vmatpush1.bf16.msra.mxu0 %v1810
    %2468 = vmatprep.subr.bf16.mxu0 %v1805
    %2469 = vmatpush1.bf16.msra.mxu0 %v1804
    %2470 = vmatprep.subr.bf16.mxu0 %v1895
    %2471 = vmatpush2.bf16.msra.mxu0 %v1894
    %2472 = vmatprep.subr.bf16.mxu0 %v1889
    %2473 = vmatpush2.bf16.msra.mxu0 %v1888
    %2474 = vmatprep.subr.bf16.mxu0 %v1883
    %2475 = vmatpush2.bf16.msra.mxu0 %v1882
    %2476 = vmatprep.subr.bf16.mxu0 %v1877
    %2477 = vmatpush2.bf16.msra.mxu0 %v1876
    %2478 = vmatprep.subr.bf16.mxu0 %v1871
    %2479 = vmatpush2.bf16.msra.mxu0 %v1870
    %2480 = vmatprep.subr.bf16.mxu0 %v1865
    %2481 = vmatpush2.bf16.msra.mxu0 %v1864
    %2482 = vmatprep.subr.bf16.mxu0 %v1859
    %2483 = vmatpush2.bf16.msra.mxu0 %v1858
    %2484 = vmatprep.subr.bf16.mxu0 %v1853
    %2485 = vmatpush2.bf16.msra.mxu0 %v1852
    %2486 = vmatprep.mubr.bf16.mxu0 %v519
    %2487 = vmatmul.mubr.bf16.gmra.mxu0 %v518
    %v2488 = vpop.f32.mrf.mxu0
    %v2489 = vadd.f32 %v2446, %v2488
    %v2490 = vpop.f32.mrf.mxu0
    %v2491 = vadd.f32 %v2448, %v2490
    %v2492 = vpop.f32.mrf.mxu0
    %v2493 = vadd.f32 %v2450, %v2492
    %v2494 = vpop.f32.mrf.mxu0
    %v2495 = vadd.f32 %v2452, %v2494
    %2496 = vdwg.mxu0
    %2497 = vmatprep.subr.bf16.mxu0 %v1943
    %2498 = vmatpush1.bf16.msra.mxu0 %v1942
    %2499 = vmatprep.subr.bf16.mxu0 %v1937
    %2500 = vmatpush1.bf16.msra.mxu0 %v1936
    %2501 = vmatprep.subr.bf16.mxu0 %v1931
    %2502 = vmatpush1.bf16.msra.mxu0 %v1930
    %2503 = vmatprep.subr.bf16.mxu0 %v1925
    %2504 = vmatpush1.bf16.msra.mxu0 %v1924
    %2505 = vmatprep.subr.bf16.mxu0 %v1919
    %2506 = vmatpush1.bf16.msra.mxu0 %v1918
    %2507 = vmatprep.subr.bf16.mxu0 %v1913
    %2508 = vmatpush1.bf16.msra.mxu0 %v1912
    %2509 = vmatprep.subr.bf16.mxu0 %v1907
    %2510 = vmatpush1.bf16.msra.mxu0 %v1906
    %2511 = vmatprep.subr.bf16.mxu0 %v1901
    %2512 = vmatpush1.bf16.msra.mxu0 %v1900
    %2513 = vmatprep.subr.bf16.mxu0 %v1991
    %2514 = vmatpush2.bf16.msra.mxu0 %v1990
    %2515 = vmatprep.subr.bf16.mxu0 %v1985
    %2516 = vmatpush2.bf16.msra.mxu0 %v1984
    %2517 = vmatprep.subr.bf16.mxu0 %v1979
    %2518 = vmatpush2.bf16.msra.mxu0 %v1978
    %2519 = vmatprep.subr.bf16.mxu0 %v1973
    %2520 = vmatpush2.bf16.msra.mxu0 %v1972
    %2521 = vmatprep.subr.bf16.mxu0 %v1967
    %2522 = vmatpush2.bf16.msra.mxu0 %v1966
    %2523 = vmatprep.subr.bf16.mxu0 %v1961
    %2524 = vmatpush2.bf16.msra.mxu0 %v1960
    %2525 = vmatprep.subr.bf16.mxu0 %v1955
    %2526 = vmatpush2.bf16.msra.mxu0 %v1954
    %2527 = vmatprep.subr.bf16.mxu0 %v1949
    %2528 = vmatpush2.bf16.msra.mxu0 %v1948
    %2529 = vmatprep.mubr.bf16.mxu0 %v521
    %2530 = vmatmul.mubr.bf16.gmra.mxu0 %v520
    %v2531 = vpop.f32.mrf.mxu0
    %v2532 = vadd.f32 %v2489, %v2531
    %v2533 = vpop.f32.mrf.mxu0
    %v2534 = vadd.f32 %v2491, %v2533
    %v2535 = vpop.f32.mrf.mxu0
    %v2536 = vadd.f32 %v2493, %v2535
    %v2537 = vpop.f32.mrf.mxu0
    %v2538 = vadd.f32 %v2495, %v2537
    %2539 = vdwg.mxu0
    %2540 = vmatprep.subr.bf16.mxu0 %v1753
    %2541 = vmatpush1.bf16.msra.mxu0 %v1752
    %2542 = vmatprep.subr.bf16.mxu0 %v1747
    %2543 = vmatpush1.bf16.msra.mxu0 %v1746
    %2544 = vmatprep.subr.bf16.mxu0 %v1741
    %2545 = vmatpush1.bf16.msra.mxu0 %v1740
    %2546 = vmatprep.subr.bf16.mxu0 %v1735
    %2547 = vmatpush1.bf16.msra.mxu0 %v1734
    %2548 = vmatprep.subr.bf16.mxu0 %v1729
    %2549 = vmatpush1.bf16.msra.mxu0 %v1728
    %2550 = vmatprep.subr.bf16.mxu0 %v1723
    %2551 = vmatpush1.bf16.msra.mxu0 %v1722
    %2552 = vmatprep.subr.bf16.mxu0 %v1717
    %2553 = vmatpush1.bf16.msra.mxu0 %v1716
    %2554 = vmatprep.subr.bf16.mxu0 %v1711
    %2555 = vmatpush1.bf16.msra.mxu0 %v1710
    %2556 = vmatprep.subr.bf16.mxu0 %v1801
    %2557 = vmatpush2.bf16.msra.mxu0 %v1800
    %2558 = vmatprep.subr.bf16.mxu0 %v1795
    %2559 = vmatpush2.bf16.msra.mxu0 %v1794
    %2560 = vmatprep.subr.bf16.mxu0 %v1789
    %2561 = vmatpush2.bf16.msra.mxu0 %v1788
    %2562 = vmatprep.subr.bf16.mxu0 %v1783
    %2563 = vmatpush2.bf16.msra.mxu0 %v1782
    %2564 = vmatprep.subr.bf16.mxu0 %v1777
    %2565 = vmatpush2.bf16.msra.mxu0 %v1776
    %2566 = vmatprep.subr.bf16.mxu0 %v1771
    %2567 = vmatpush2.bf16.msra.mxu0 %v1770
    %2568 = vmatprep.subr.bf16.mxu0 %v1765
    %2569 = vmatpush2.bf16.msra.mxu0 %v1764
    %2570 = vmatprep.subr.bf16.mxu0 %v1759
    %2571 = vmatpush2.bf16.msra.mxu0 %v1758
    %2572 = vmatprep.mubr.bf16.mxu0 %v517
    %2573 = vmatmul.mubr.bf16.gmra.mxu0 %v516
    %v2574 = vpop.f32.mrf.mxu0
    %v2575 = vadd.f32 %v831, %v2574
    %v2576 = vpop.f32.mrf.mxu0
    %v2577 = vadd.f32 %v835, %v2576
    %v2578 = vpop.f32.mrf.mxu0
    %v2579 = vadd.f32 %v831, %v2578
    %v2580 = vpop.f32.mrf.mxu0
    %v2581 = vadd.f32 %v835, %v2580
    %2582 = vdwg.mxu0
    %2583 = vmatprep.subr.bf16.mxu0 %v1849
    %2584 = vmatpush1.bf16.msra.mxu0 %v1848
    %2585 = vmatprep.subr.bf16.mxu0 %v1843
    %2586 = vmatpush1.bf16.msra.mxu0 %v1842
    %2587 = vmatprep.subr.bf16.mxu0 %v1837
    %2588 = vmatpush1.bf16.msra.mxu0 %v1836
    %2589 = vmatprep.subr.bf16.mxu0 %v1831
    %2590 = vmatpush1.bf16.msra.mxu0 %v1830
    %2591 = vmatprep.subr.bf16.mxu0 %v1825
    %2592 = vmatpush1.bf16.msra.mxu0 %v1824
    %2593 = vmatprep.subr.bf16.mxu0 %v1819
    %2594 = vmatpush1.bf16.msra.mxu0 %v1818
    %2595 = vmatprep.subr.bf16.mxu0 %v1813
    %2596 = vmatpush1.bf16.msra.mxu0 %v1812
    %2597 = vmatprep.subr.bf16.mxu0 %v1807
    %2598 = vmatpush1.bf16.msra.mxu0 %v1806
    %2599 = vmatprep.subr.bf16.mxu0 %v1897
    %2600 = vmatpush2.bf16.msra.mxu0 %v1896
    %2601 = vmatprep.subr.bf16.mxu0 %v1891
    %2602 = vmatpush2.bf16.msra.mxu0 %v1890
    %2603 = vmatprep.subr.bf16.mxu0 %v1885
    %2604 = vmatpush2.bf16.msra.mxu0 %v1884
    %2605 = vmatprep.subr.bf16.mxu0 %v1879
    %2606 = vmatpush2.bf16.msra.mxu0 %v1878
    %2607 = vmatprep.subr.bf16.mxu0 %v1873
    %2608 = vmatpush2.bf16.msra.mxu0 %v1872
    %2609 = vmatprep.subr.bf16.mxu0 %v1867
    %2610 = vmatpush2.bf16.msra.mxu0 %v1866
    %2611 = vmatprep.subr.bf16.mxu0 %v1861
    %2612 = vmatpush2.bf16.msra.mxu0 %v1860
    %2613 = vmatprep.subr.bf16.mxu0 %v1855
    %2614 = vmatpush2.bf16.msra.mxu0 %v1854
    %2615 = vmatprep.mubr.bf16.mxu0 %v519
    %2616 = vmatmul.mubr.bf16.gmra.mxu0 %v518
    %v2617 = vpop.f32.mrf.mxu0
    %v2618 = vadd.f32 %v2575, %v2617
    %v2619 = vpop.f32.mrf.mxu0
    %v2620 = vadd.f32 %v2577, %v2619
    %v2621 = vpop.f32.mrf.mxu0
    %v2622 = vadd.f32 %v2579, %v2621
    %v2623 = vpop.f32.mrf.mxu0
    %v2624 = vadd.f32 %v2581, %v2623
    %2625 = vdwg.mxu0
    %2626 = vmatprep.subr.bf16.mxu0 %v1945
    %2627 = vmatpush1.bf16.msra.mxu0 %v1944
    %2628 = vmatprep.subr.bf16.mxu0 %v1939
    %2629 = vmatpush1.bf16.msra.mxu0 %v1938
    %2630 = vmatprep.subr.bf16.mxu0 %v1933
    %2631 = vmatpush1.bf16.msra.mxu0 %v1932
    %2632 = vmatprep.subr.bf16.mxu0 %v1927
    %2633 = vmatpush1.bf16.msra.mxu0 %v1926
    %2634 = vmatprep.subr.bf16.mxu0 %v1921
    %2635 = vmatpush1.bf16.msra.mxu0 %v1920
    %2636 = vmatprep.subr.bf16.mxu0 %v1915
    %2637 = vmatpush1.bf16.msra.mxu0 %v1914
    %2638 = vmatprep.subr.bf16.mxu0 %v1909
    %2639 = vmatpush1.bf16.msra.mxu0 %v1908
    %2640 = vmatprep.subr.bf16.mxu0 %v1903
    %2641 = vmatpush1.bf16.msra.mxu0 %v1902
    %2642 = vmatprep.subr.bf16.mxu0 %v1993
    %2643 = vmatpush2.bf16.msra.mxu0 %v1992
    %2644 = vmatprep.subr.bf16.mxu0 %v1987
    %2645 = vmatpush2.bf16.msra.mxu0 %v1986
    %2646 = vmatprep.subr.bf16.mxu0 %v1981
    %2647 = vmatpush2.bf16.msra.mxu0 %v1980
    %2648 = vmatprep.subr.bf16.mxu0 %v1975
    %2649 = vmatpush2.bf16.msra.mxu0 %v1974
    %2650 = vmatprep.subr.bf16.mxu0 %v1969
    %2651 = vmatpush2.bf16.msra.mxu0 %v1968
    %2652 = vmatprep.subr.bf16.mxu0 %v1963
    %2653 = vmatpush2.bf16.msra.mxu0 %v1962
    %2654 = vmatprep.subr.bf16.mxu0 %v1957
    %2655 = vmatpush2.bf16.msra.mxu0 %v1956
    %2656 = vmatprep.subr.bf16.mxu0 %v1951
    %2657 = vmatpush2.bf16.msra.mxu0 %v1950
    %2658 = vmatprep.mubr.bf16.mxu0 %v521
    %2659 = vmatmul.mubr.bf16.gmra.mxu0 %v520
    %v2660 = vpop.f32.mrf.mxu0
    %v2661 = vadd.f32 %v2618, %v2660
    %v2662 = vpop.f32.mrf.mxu0
    %v2663 = vadd.f32 %v2620, %v2662
    %v2664 = vpop.f32.mrf.mxu0
    %v2665 = vadd.f32 %v2622, %v2664
    %v2666 = vpop.f32.mrf.mxu0
    %v2667 = vadd.f32 %v2624, %v2666
    %2668 = vdwg.mxu0
    %v2669 = vtanh.pop %v2403
    %v2670 = vtanh.pop %v2405
    %v2671 = vtanh.pop %v2532
    %v2672 = vtanh.pop %v2534
    %v2673 = vtanh.pop %v2661
    %v2674 = vtanh.pop %v2663
    %v2675 = vtanh.pop %v2407
    %v2676 = vtanh.pop %v2409
    %v2677 = vtanh.pop %v2536
    %v2678 = vtanh.pop %v2538
    %v2679 = vtanh.pop %v2665
    %v2680 = vtanh.pop %v2667
    %v2681 = vpack.c.bf16 %v2675, %v2669
    %v2682 = vpack.c.bf16 %v2676, %v2670
    %v2683 = vpack.c.bf16 %v2677, %v2671
    %v2684 = vpack.c.bf16 %v2678, %v2672
    %v2685 = vpack.c.bf16 %v2679, %v2673
    %v2686 = vpack.c.bf16 %v2680, %v2674
    %v2687 = vld [vmem:[%s4] sm:$0xf]
    %v2688 = vld [vmem:[%s4 + $0x4] sm:$0xf]
    %v2689 = vld [vmem:[%s4 + $0x8] sm:$0xf]
    %v2690 = vld [vmem:[%s4 + $0xc] sm:$0xf]
    %v2691 = vld [vmem:[%s4 + $0x10] sm:$0xf]
    %v2692 = vld [vmem:[%s4 + $0x14] sm:$0xf]
    %v2693 = vld [vmem:[%s4 + $0x18] sm:$0xf]
    %v2694 = vld [vmem:[%s4 + $0x1c] sm:$0xf]
    %v2695 = vld [vmem:[%s4 + $0x20] sm:$0xf]
    %v2696 = vld [vmem:[%s4 + $0x24] sm:$0xf]
    %v2697 = vld [vmem:[%s4 + $0x28] sm:$0xf]
    %v2698 = vld [vmem:[%s4 + $0x2c] sm:$0xf]
    %v2699 = vld [vmem:[%s4 + $0x30] sm:$0xf]
    %v2700 = vld [vmem:[%s4 + $0x34] sm:$0xf]
    %v2701 = vld [vmem:[%s4 + $0x38] sm:$0xf]
    %v2702 = vld [vmem:[%s4 + $0x3c] sm:$0xf]
    %v2703 = vld [vmem:[%s4 + $0x40] sm:$0xf]
    %v2704 = vld [vmem:[%s4 + $0x44] sm:$0xf]
    %v2705 = vld [vmem:[%s4 + $0x48] sm:$0xf]
    %v2706 = vld [vmem:[%s4 + $0x4c] sm:$0xf]
    %v2707 = vld [vmem:[%s4 + $0x50] sm:$0xf]
    %v2708 = vld [vmem:[%s4 + $0x54] sm:$0xf]
    %v2709 = vld [vmem:[%s4 + $0x58] sm:$0xf]
    %v2710 = vld [vmem:[%s4 + $0x5c] sm:$0xf]
    %v2711 = vld [vmem:[%s4 + $0x60] sm:$0xf]
    %v2712 = vld [vmem:[%s4 + $0x64] sm:$0xf]
    %v2713 = vld [vmem:[%s4 + $0x68] sm:$0xf]
    %v2714 = vld [vmem:[%s4 + $0x6c] sm:$0xf]
    %v2715 = vld [vmem:[%s4 + $0x70] sm:$0xf]
    %v2716 = vld [vmem:[%s4 + $0x74] sm:$0xf]
    %v2717 = vld [vmem:[%s4 + $0x78] sm:$0xf]
    %v2718 = vld [vmem:[%s4 + $0x7c] sm:$0xf]
    %v2719 = vld [vmem:[%s4 + $0x80] sm:$0xf]
    %v2720 = vld [vmem:[%s4 + $0x84] sm:$0xf]
    %v2721 = vld [vmem:[%s4 + $0x88] sm:$0xf]
    %v2722 = vld [vmem:[%s4 + $0x8c] sm:$0xf]
    %v2723 = vld [vmem:[%s4 + $0x90] sm:$0xf]
    %v2724 = vld [vmem:[%s4 + $0x94] sm:$0xf]
    %v2725 = vld [vmem:[%s4 + $0x98] sm:$0xf]
    %v2726 = vld [vmem:[%s4 + $0x9c] sm:$0xf]
    %v2727 = vld [vmem:[%s4 + $0xa0] sm:$0xf]
    %v2728 = vld [vmem:[%s4 + $0xa4] sm:$0xf]
    %v2729 = vld [vmem:[%s4 + $0xa8] sm:$0xf]
    %v2730 = vld [vmem:[%s4 + $0xac] sm:$0xf]
    %v2731 = vld [vmem:[%s4 + $0xb0] sm:$0xf]
    %v2732 = vld [vmem:[%s4 + $0xb4] sm:$0xf]
    %v2733 = vld [vmem:[%s4 + $0xb8] sm:$0xf]
    %v2734 = vld [vmem:[%s4 + $0xbc] sm:$0xf]
    %v2735 = vld [vmem:[%s4 + $0xc0] sm:$0xf]
    %v2736 = vld [vmem:[%s4 + $0xc4] sm:$0xf]
    %v2737 = vld [vmem:[%s4 + $0xc8] sm:$0xf]
    %v2738 = vld [vmem:[%s4 + $0xcc] sm:$0xf]
    %v2739 = vld [vmem:[%s4 + $0xd0] sm:$0xf]
    %v2740 = vld [vmem:[%s4 + $0xd4] sm:$0xf]
    %v2741 = vld [vmem:[%s4 + $0xd8] sm:$0xf]
    %v2742 = vld [vmem:[%s4 + $0xdc] sm:$0xf]
    %v2743 = vld [vmem:[%s4 + $0xe0] sm:$0xf]
    %v2744 = vld [vmem:[%s4 + $0xe4] sm:$0xf]
    %v2745 = vld [vmem:[%s4 + $0xe8] sm:$0xf]
    %v2746 = vld [vmem:[%s4 + $0xec] sm:$0xf]
    %v2747 = vld [vmem:[%s4 + $0xf0] sm:$0xf]
    %v2748 = vld [vmem:[%s4 + $0xf4] sm:$0xf]
    %v2749 = vld [vmem:[%s4 + $0xf8] sm:$0xf]
    %v2750 = vld [vmem:[%s4 + $0xfc] sm:$0xf]
    %v2751 = vld [vmem:[%s4 + $0x100] sm:$0xf]
    %v2752 = vld [vmem:[%s4 + $0x104] sm:$0xf]
    %v2753 = vld [vmem:[%s4 + $0x108] sm:$0xf]
    %v2754 = vld [vmem:[%s4 + $0x10c] sm:$0xf]
    %v2755 = vld [vmem:[%s4 + $0x110] sm:$0xf]
    %v2756 = vld [vmem:[%s4 + $0x114] sm:$0xf]
    %v2757 = vld [vmem:[%s4 + $0x118] sm:$0xf]
    %v2758 = vld [vmem:[%s4 + $0x11c] sm:$0xf]
    %v2759 = vld [vmem:[%s4 + $0x120] sm:$0xf]
    %v2760 = vld [vmem:[%s4 + $0x124] sm:$0xf]
    %v2761 = vld [vmem:[%s4 + $0x128] sm:$0xf]
    %v2762 = vld [vmem:[%s4 + $0x12c] sm:$0xf]
    %v2763 = vld [vmem:[%s4 + $0x130] sm:$0xf]
    %v2764 = vld [vmem:[%s4 + $0x134] sm:$0xf]
    %v2765 = vld [vmem:[%s4 + $0x138] sm:$0xf]
    %v2766 = vld [vmem:[%s4 + $0x13c] sm:$0xf]
    %v2767 = vld [vmem:[%s4 + $0x140] sm:$0xf]
    %v2768 = vld [vmem:[%s4 + $0x144] sm:$0xf]
    %v2769 = vld [vmem:[%s4 + $0x148] sm:$0xf]
    %v2770 = vld [vmem:[%s4 + $0x14c] sm:$0xf]
    %v2771 = vld [vmem:[%s4 + $0x150] sm:$0xf]
    %v2772 = vld [vmem:[%s4 + $0x154] sm:$0xf]
    %v2773 = vld [vmem:[%s4 + $0x158] sm:$0xf]
    %v2774 = vld [vmem:[%s4 + $0x15c] sm:$0xf]
    %v2775 = vld [vmem:[%s4 + $0x160] sm:$0xf]
    %v2776 = vld [vmem:[%s4 + $0x164] sm:$0xf]
    %v2777 = vld [vmem:[%s4 + $0x168] sm:$0xf]
    %v2778 = vld [vmem:[%s4 + $0x16c] sm:$0xf]
    %v2779 = vld [vmem:[%s4 + $0x170] sm:$0xf]
    %v2780 = vld [vmem:[%s4 + $0x174] sm:$0xf]
    %v2781 = vld [vmem:[%s4 + $0x178] sm:$0xf]
    %v2782 = vld [vmem:[%s4 + $0x17c] sm:$0xf]
    %v2783 = vld [vmem:[%s5] sm:$0x1]
    %v2785 = vlaneseq
    %v2786 = vshrl.u32 %v2785, 7
    %v2787 = vsub.s32 0, %v2786
    %v2788 = vrot.slane %v2783, %v2787
    %v2886 = vunpack.c.l.b16 %v2687
    %v2887 = vunpack.c.l.b16 %v2688
    %v2888 = vunpack.c.l.b16 %v2689
    %v2889 = vunpack.c.l.b16 %v2690
    %v2890 = vunpack.c.l.b16 %v2691
    %v2891 = vunpack.c.l.b16 %v2692
    %v2892 = vunpack.c.l.b16 %v2693
    %v2893 = vunpack.c.l.b16 %v2694
    %v2894 = vunpack.c.l.b16 %v2695
    %v2895 = vunpack.c.l.b16 %v2696
    %v2896 = vunpack.c.l.b16 %v2697
    %v2897 = vunpack.c.l.b16 %v2698
    %v2898 = vunpack.c.l.b16 %v2699
    %v2899 = vunpack.c.l.b16 %v2700
    %v2900 = vunpack.c.l.b16 %v2701
    %v2901 = vunpack.c.l.b16 %v2702
    %v2902 = vunpack.c.l.b16 %v2703
    %v2903 = vunpack.c.l.b16 %v2704
    %v2904 = vunpack.c.l.b16 %v2705
    %v2905 = vunpack.c.l.b16 %v2706
    %v2906 = vunpack.c.l.b16 %v2707
    %v2907 = vunpack.c.l.b16 %v2708
    %v2908 = vunpack.c.l.b16 %v2709
    %v2909 = vunpack.c.l.b16 %v2710
    %v2910 = vunpack.c.l.b16 %v2711
    %v2911 = vunpack.c.l.b16 %v2712
    %v2912 = vunpack.c.l.b16 %v2713
    %v2913 = vunpack.c.l.b16 %v2714
    %v2914 = vunpack.c.l.b16 %v2715
    %v2915 = vunpack.c.l.b16 %v2716
    %v2916 = vunpack.c.l.b16 %v2717
    %v2917 = vunpack.c.l.b16 %v2718
    %v2918 = vunpack.c.l.b16 %v2719
    %v2919 = vunpack.c.l.b16 %v2720
    %v2920 = vunpack.c.l.b16 %v2721
    %v2921 = vunpack.c.l.b16 %v2722
    %v2922 = vunpack.c.l.b16 %v2723
    %v2923 = vunpack.c.l.b16 %v2724
    %v2924 = vunpack.c.l.b16 %v2725
    %v2925 = vunpack.c.l.b16 %v2726
    %v2926 = vunpack.c.l.b16 %v2727
    %v2927 = vunpack.c.l.b16 %v2728
    %v2928 = vunpack.c.l.b16 %v2729
    %v2929 = vunpack.c.l.b16 %v2730
    %v2930 = vunpack.c.l.b16 %v2731
    %v2931 = vunpack.c.l.b16 %v2732
    %v2932 = vunpack.c.l.b16 %v2733
    %v2933 = vunpack.c.l.b16 %v2734
    %v2934 = vunpack.c.l.b16 %v2735
    %v2935 = vunpack.c.l.b16 %v2736
    %v2936 = vunpack.c.l.b16 %v2737
    %v2937 = vunpack.c.l.b16 %v2738
    %v2938 = vunpack.c.l.b16 %v2739
    %v2939 = vunpack.c.l.b16 %v2740
    %v2940 = vunpack.c.l.b16 %v2741
    %v2941 = vunpack.c.l.b16 %v2742
    %v2942 = vunpack.c.l.b16 %v2743
    %v2943 = vunpack.c.l.b16 %v2744
    %v2944 = vunpack.c.l.b16 %v2745
    %v2945 = vunpack.c.l.b16 %v2746
    %v2946 = vunpack.c.l.b16 %v2747
    %v2947 = vunpack.c.l.b16 %v2748
    %v2948 = vunpack.c.l.b16 %v2749
    %v2949 = vunpack.c.l.b16 %v2750
    %v2950 = vunpack.c.l.b16 %v2751
    %v2951 = vunpack.c.l.b16 %v2752
    %v2952 = vunpack.c.l.b16 %v2753
    %v2953 = vunpack.c.l.b16 %v2754
    %v2954 = vunpack.c.l.b16 %v2755
    %v2955 = vunpack.c.l.b16 %v2756
    %v2956 = vunpack.c.l.b16 %v2757
    %v2957 = vunpack.c.l.b16 %v2758
    %v2958 = vunpack.c.l.b16 %v2759
    %v2959 = vunpack.c.l.b16 %v2760
    %v2960 = vunpack.c.l.b16 %v2761
    %v2961 = vunpack.c.l.b16 %v2762
    %v2962 = vunpack.c.l.b16 %v2763
    %v2963 = vunpack.c.l.b16 %v2764
    %v2964 = vunpack.c.l.b16 %v2765
    %v2965 = vunpack.c.l.b16 %v2766
    %v2966 = vunpack.c.l.b16 %v2767
    %v2967 = vunpack.c.l.b16 %v2768
    %v2968 = vunpack.c.l.b16 %v2769
    %v2969 = vunpack.c.l.b16 %v2770
    %v2970 = vunpack.c.l.b16 %v2771
    %v2971 = vunpack.c.l.b16 %v2772
    %v2972 = vunpack.c.l.b16 %v2773
    %v2973 = vunpack.c.l.b16 %v2774
    %v2974 = vunpack.c.l.b16 %v2775
    %v2975 = vunpack.c.l.b16 %v2776
    %v2976 = vunpack.c.l.b16 %v2777
    %v2977 = vunpack.c.l.b16 %v2778
    %v2978 = vunpack.c.l.b16 %v2779
    %v2979 = vunpack.c.l.b16 %v2780
    %v2980 = vunpack.c.l.b16 %v2781
    %v2981 = vunpack.c.l.b16 %v2782
    %v2982 = vpack.c.b16 %v2887, %v2886
    %v2983 = vpack.c.b16 %v2889, %v2888
    %v2984 = vpack.c.b16 %v2891, %v2890
    %v2985 = vpack.c.b16 %v2893, %v2892
    %v2986 = vpack.c.b16 %v2895, %v2894
    %v2987 = vpack.c.b16 %v2897, %v2896
    %v2988 = vpack.c.b16 %v2899, %v2898
    %v2989 = vpack.c.b16 %v2901, %v2900
    %v2990 = vpack.c.b16 %v2903, %v2902
    %v2991 = vpack.c.b16 %v2905, %v2904
    %v2992 = vpack.c.b16 %v2907, %v2906
    %v2993 = vpack.c.b16 %v2909, %v2908
    %v2994 = vpack.c.b16 %v2911, %v2910
    %v2995 = vpack.c.b16 %v2913, %v2912
    %v2996 = vpack.c.b16 %v2915, %v2914
    %v2997 = vpack.c.b16 %v2917, %v2916
    %v2998 = vpack.c.b16 %v2919, %v2918
    %v2999 = vpack.c.b16 %v2921, %v2920
    %v3000 = vpack.c.b16 %v2923, %v2922
    %v3001 = vpack.c.b16 %v2925, %v2924
    %v3002 = vpack.c.b16 %v2927, %v2926
    %v3003 = vpack.c.b16 %v2929, %v2928
    %v3004 = vpack.c.b16 %v2931, %v2930
    %v3005 = vpack.c.b16 %v2933, %v2932
    %v3006 = vpack.c.b16 %v2935, %v2934
    %v3007 = vpack.c.b16 %v2937, %v2936
    %v3008 = vpack.c.b16 %v2939, %v2938
    %v3009 = vpack.c.b16 %v2941, %v2940
    %v3010 = vpack.c.b16 %v2943, %v2942
    %v3011 = vpack.c.b16 %v2945, %v2944
    %v3012 = vpack.c.b16 %v2947, %v2946
    %v3013 = vpack.c.b16 %v2949, %v2948
    %v3014 = vpack.c.b16 %v2951, %v2950
    %v3015 = vpack.c.b16 %v2953, %v2952
    %v3016 = vpack.c.b16 %v2955, %v2954
    %v3017 = vpack.c.b16 %v2957, %v2956
    %v3018 = vpack.c.b16 %v2959, %v2958
    %v3019 = vpack.c.b16 %v2961, %v2960
    %v3020 = vpack.c.b16 %v2963, %v2962
    %v3021 = vpack.c.b16 %v2965, %v2964
    %v3022 = vpack.c.b16 %v2967, %v2966
    %v3023 = vpack.c.b16 %v2969, %v2968
    %v3024 = vpack.c.b16 %v2971, %v2970
    %v3025 = vpack.c.b16 %v2973, %v2972
    %v3026 = vpack.c.b16 %v2975, %v2974
    %v3027 = vpack.c.b16 %v2977, %v2976
    %v3028 = vpack.c.b16 %v2979, %v2978
    %v3029 = vpack.c.b16 %v2981, %v2980
    %3078 = vmatprep.subr.bf16.mxu0 0
    %3079 = vmatpush1.bf16.msra.mxu0 %v2989
    %3080 = vmatprep.subr.bf16.mxu0 0
    %3081 = vmatpush1.bf16.msra.mxu0 %v2988
    %3082 = vmatprep.subr.bf16.mxu0 0
    %3083 = vmatpush1.bf16.msra.mxu0 %v2987
    %3084 = vmatprep.subr.bf16.mxu0 0
    %3085 = vmatpush1.bf16.msra.mxu0 %v2986
    %3086 = vmatprep.subr.bf16.mxu0 0
    %3087 = vmatpush1.bf16.msra.mxu0 %v2985
    %3088 = vmatprep.subr.bf16.mxu0 0
    %3089 = vmatpush1.bf16.msra.mxu0 %v2984
    %3090 = vmatprep.subr.bf16.mxu0 0
    %3091 = vmatpush1.bf16.msra.mxu0 %v2983
    %3092 = vmatprep.subr.bf16.mxu0 0
    %3093 = vmatpush1.bf16.msra.mxu0 %v2982
    %3094 = vmatprep.subr.bf16.mxu0 0
    %3095 = vmatpush2.bf16.msra.mxu0 %v2997
    %3096 = vmatprep.subr.bf16.mxu0 0
    %3097 = vmatpush2.bf16.msra.mxu0 %v2996
    %3098 = vmatprep.subr.bf16.mxu0 0
    %3099 = vmatpush2.bf16.msra.mxu0 %v2995
    %3100 = vmatprep.subr.bf16.mxu0 0
    %3101 = vmatpush2.bf16.msra.mxu0 %v2994
    %3102 = vmatprep.subr.bf16.mxu0 0
    %3103 = vmatpush2.bf16.msra.mxu0 %v2993
    %3104 = vmatprep.subr.bf16.mxu0 0
    %3105 = vmatpush2.bf16.msra.mxu0 %v2992
    %3106 = vmatprep.subr.bf16.mxu0 0
    %3107 = vmatpush2.bf16.msra.mxu0 %v2991
    %3108 = vmatprep.subr.bf16.mxu0 0
    %3109 = vmatpush2.bf16.msra.mxu0 %v2990
    %3110 = vmatprep.mubr.bf16.mxu0 %v2682
    %3111 = vmatmul.mubr.bf16.gmra.mxu0 %v2681
    %v3112 = vpop.f32.mrf.mxu0
    %v3113 = vadd.f32 %v2788, %v3112
    %v3114 = vpop.f32.mrf.mxu0
    %v3115 = vpop.f32.mrf.mxu0
    %v3116 = vadd.f32 %v2788, %v3115
    %v3117 = vpop.f32.mrf.mxu0
    %3118 = vdwg.mxu0
    %3119 = vmatprep.subr.bf16.mxu0 0
    %3120 = vmatpush1.bf16.msra.mxu0 %v3005
    %3121 = vmatprep.subr.bf16.mxu0 0
    %3122 = vmatpush1.bf16.msra.mxu0 %v3004
    %3123 = vmatprep.subr.bf16.mxu0 0
    %3124 = vmatpush1.bf16.msra.mxu0 %v3003
    %3125 = vmatprep.subr.bf16.mxu0 0
    %3126 = vmatpush1.bf16.msra.mxu0 %v3002
    %3127 = vmatprep.subr.bf16.mxu0 0
    %3128 = vmatpush1.bf16.msra.mxu0 %v3001
    %3129 = vmatprep.subr.bf16.mxu0 0
    %3130 = vmatpush1.bf16.msra.mxu0 %v3000
    %3131 = vmatprep.subr.bf16.mxu0 0
    %3132 = vmatpush1.bf16.msra.mxu0 %v2999
    %3133 = vmatprep.subr.bf16.mxu0 0
    %3134 = vmatpush1.bf16.msra.mxu0 %v2998
    %3135 = vmatprep.subr.bf16.mxu0 0
    %3136 = vmatpush2.bf16.msra.mxu0 %v3013
    %3137 = vmatprep.subr.bf16.mxu0 0
    %3138 = vmatpush2.bf16.msra.mxu0 %v3012
    %3139 = vmatprep.subr.bf16.mxu0 0
    %3140 = vmatpush2.bf16.msra.mxu0 %v3011
    %3141 = vmatprep.subr.bf16.mxu0 0
    %3142 = vmatpush2.bf16.msra.mxu0 %v3010
    %3143 = vmatprep.subr.bf16.mxu0 0
    %3144 = vmatpush2.bf16.msra.mxu0 %v3009
    %3145 = vmatprep.subr.bf16.mxu0 0
    %3146 = vmatpush2.bf16.msra.mxu0 %v3008
    %3147 = vmatprep.subr.bf16.mxu0 0
    %3148 = vmatpush2.bf16.msra.mxu0 %v3007
    %3149 = vmatprep.subr.bf16.mxu0 0
    %3150 = vmatpush2.bf16.msra.mxu0 %v3006
    %3151 = vmatprep.mubr.bf16.mxu0 %v2684
    %3152 = vmatmul.mubr.bf16.gmra.mxu0 %v2683
    %v3153 = vpop.f32.mrf.mxu0
    %v3154 = vadd.f32 %v3113, %v3153
    %v3155 = vpop.f32.mrf.mxu0
    %v3156 = vpop.f32.mrf.mxu0
    %v3157 = vadd.f32 %v3116, %v3156
    %v3158 = vpop.f32.mrf.mxu0
    %3159 = vdwg.mxu0
    %3160 = vmatprep.subr.bf16.mxu0 0
    %3161 = vmatpush1.bf16.msra.mxu0 %v3021
    %3162 = vmatprep.subr.bf16.mxu0 0
    %3163 = vmatpush1.bf16.msra.mxu0 %v3020
    %3164 = vmatprep.subr.bf16.mxu0 0
    %3165 = vmatpush1.bf16.msra.mxu0 %v3019
    %3166 = vmatprep.subr.bf16.mxu0 0
    %3167 = vmatpush1.bf16.msra.mxu0 %v3018
    %3168 = vmatprep.subr.bf16.mxu0 0
    %3169 = vmatpush1.bf16.msra.mxu0 %v3017
    %3170 = vmatprep.subr.bf16.mxu0 0
    %3171 = vmatpush1.bf16.msra.mxu0 %v3016
    %3172 = vmatprep.subr.bf16.mxu0 0
    %3173 = vmatpush1.bf16.msra.mxu0 %v3015
    %3174 = vmatprep.subr.bf16.mxu0 0
    %3175 = vmatpush1.bf16.msra.mxu0 %v3014
    %3176 = vmatprep.subr.bf16.mxu0 0
    %3177 = vmatpush2.bf16.msra.mxu0 %v3029
    %3178 = vmatprep.subr.bf16.mxu0 0
    %3179 = vmatpush2.bf16.msra.mxu0 %v3028
    %3180 = vmatprep.subr.bf16.mxu0 0
    %3181 = vmatpush2.bf16.msra.mxu0 %v3027
    %3182 = vmatprep.subr.bf16.mxu0 0
    %3183 = vmatpush2.bf16.msra.mxu0 %v3026
    %3184 = vmatprep.subr.bf16.mxu0 0
    %3185 = vmatpush2.bf16.msra.mxu0 %v3025
    %3186 = vmatprep.subr.bf16.mxu0 0
    %3187 = vmatpush2.bf16.msra.mxu0 %v3024
    %3188 = vmatprep.subr.bf16.mxu0 0
    %3189 = vmatpush2.bf16.msra.mxu0 %v3023
    %3190 = vmatprep.subr.bf16.mxu0 0
    %3191 = vmatpush2.bf16.msra.mxu0 %v3022
    %3192 = vmatprep.mubr.bf16.mxu0 %v2686
    %3193 = vmatmul.mubr.bf16.gmra.mxu0 %v2685
    %v3194 = vpop.f32.mrf.mxu0
    %v3195 = vadd.f32 %v3154, %v3194
    %v3196 = vpop.f32.mrf.mxu0
    %v3197 = vpop.f32.mrf.mxu0
    %v3198 = vadd.f32 %v3157, %v3197
    %v3199 = vpop.f32.mrf.mxu0
    %3200 = vdwg.mxu0
    %3201 = vst [vmem:[%s6] sm:$0xff] %v3195
    %3202 = vst [vmem:[%s6 + $0x8] sm:$0xff] %v3198
  $region33: #{cls_model_forward.1} parent=0 // pred_fallthru
    _
  // Predicated region
  $region34: #{cls_model_forward.1} parent=0 // pred_check
    _
  $region35: #{cls_model_forward.1} parent=0 // pred_check_branch
    %3204 = sbr.rel (0) target = $region37
  $region36: #{cls_model_forward.1} parent=0 // pred_region
    _
  $region37: #{cls_model_forward.1} parent=0 // pred_fallthru
    _
  // Predicated region
  $region38: #{cls_model_forward.1} parent=0 // pred_check
    _
  $region39: #{cls_model_forward.1} parent=0 // pred_check_branch
    %3206 = sbr.rel (0) target = $region41
  $region40: #{cls_model_forward.1} parent=0 // pred_region
    _
  $region41: #{cls_model_forward.1} parent=0 // pred_fallthru
    _

</llo_original>
